<compile_context>
chip_gen: v6e
topology: v6e:2x2x1
jax: 0.10.0
libtpu: 0.0.40
codegen_flags: <defaults>
</compile_context>

<pallas_src>
import functools

import jax
import jax.numpy as jnp
from jax.experimental import pallas as pl
from jax.experimental.pallas import tpu as pltpu


def _layer_norm(v, g, b, eps=1e-5):
    mu = jnp.mean(v, axis=-1, keepdims=True)
    var = jnp.mean((v - mu) ** 2, axis=-1, keepdims=True)
    return (v - mu) * jax.lax.rsqrt(var + eps) * g + b


def _encoder_layer_kernel(
    x_ref,        # (T, C) f32   one batch element's tokens
    wqkv_ref,     # (C, 3C)      fused wq|wk|wv   (compute dtype)
    wo_ref,       # (C, C)
    w1_ref,       # (C, F)
    b1_ref,       # (1, F) f32
    w2_ref,       # (F, C)
    vec_ref,      # (9, C) f32   packed: bq, bk, bv, bo, b2, ln1_g, ln1_b, ln2_g, ln2_b
    out_ref,      # (T, C) f32
    *adapt_refs,  # optionally ((T, C) f32,)
    num_heads, head_dim,
):
    T, C = x_ref.shape
    cdt = wqkv_ref.dtype            # MXU operand dtype (f32 or bf16)
    x = x_ref[...]                  # f32

    # ---- fused QKV projection: one MXU pass, f32 accumulation ----
    qkv = jnp.dot(x.astype(cdt), wqkv_ref[...],
                  preferred_element_type=jnp.float32)               # (T, 3C) f32
    scaling = head_dim ** -0.5
    q = (qkv[:, 0:C] + vec_ref[0:1, :]) * scaling
    k = qkv[:, C:2 * C] + vec_ref[1:2, :]
    v = qkv[:, 2 * C:3 * C] + vec_ref[2:3, :]

    # ---- heads as a leading batch dim; batched MXU contractions ----
    q3 = jnp.swapaxes(q.reshape(T, num_heads, head_dim), 0, 1)      # (H, T, hd)
    k3 = jnp.swapaxes(k.reshape(T, num_heads, head_dim), 0, 1)
    v3 = jnp.swapaxes(v.reshape(T, num_heads, head_dim), 0, 1)

    s = jnp.einsum("hqd,hkd->hqk", q3.astype(cdt), k3.astype(cdt),
                   preferred_element_type=jnp.float32)              # (H, T, T) f32
    m = jnp.max(s, axis=-1, keepdims=True)
    p = jnp.exp(s - m)
    p = p / jnp.sum(p, axis=-1, keepdims=True)                      # exact softmax (f32)
    o3 = jnp.einsum("hqk,hkd->hqd", p.astype(cdt), v3.astype(cdt),
                    preferred_element_type=jnp.float32)             # (H, T, hd) f32

    o2 = jnp.swapaxes(o3, 0, 1).reshape(T, C)                       # (T, C)
    attn = jnp.dot(o2.astype(cdt), wo_ref[...],
                   preferred_element_type=jnp.float32) + vec_ref[3:4, :]

    # ---- residual + self_attn_layer_norm (f32) ----
    x1 = _layer_norm(x + attn, vec_ref[5:6, :], vec_ref[6:7, :])

    # ---- FFN: relu(fc1) -> fc2, f32 accumulation ----
    h1 = jnp.dot(x1.astype(cdt), w1_ref[...],
                 preferred_element_type=jnp.float32) + b1_ref[...]
    h1 = jnp.maximum(h1, 0.0)
    y = jnp.dot(h1.astype(cdt), w2_ref[...],
                preferred_element_type=jnp.float32) + vec_ref[4:5, :]

    if adapt_refs:                     # in_adapter_features (pass_adapter=False path)
        adapt_refs[0][...] = y

    # ---- residual + final_layer_norm ----
    out_ref[...] = _layer_norm(x1 + y, vec_ref[7:8, :], vec_ref[8:9, :])


def transformer_ada_layer(x_tbc, params, *, num_heads,
                          compute_dtype=jnp.float32,
                          return_adapter_features=True):
    """x_tbc: (T, B, C) float32 (fairseq layout).
    Returns (out (T,B,C), attn=None, in_adapter_features (T,B,C) or None)."""
    T, B, C = x_tbc.shape
    F = params["w1"].shape[1]
    head_dim = C // num_heads

    # Parameter packing (one fused QKV weight + one slab of C-wide vectors).
    # In production this packing / bf16 cast would be done once at load time.
    w_qkv = jnp.concatenate([params["wq"], params["wk"], params["wv"]], axis=1)
    w_qkv = w_qkv.astype(compute_dtype)                              # (C, 3C)
    wo = params["wo"].astype(compute_dtype)
    w1 = params["w1"].astype(compute_dtype)
    w2 = params["w2"].astype(compute_dtype)
    b1 = params["b1"].astype(jnp.float32)
    vec = jnp.concatenate(
        [params["bq"], params["bk"], params["bv"], params["bo"], params["b2"],
         params["ln1_g"], params["ln1_b"], params["ln2_g"], params["ln2_b"]],
        axis=0).astype(jnp.float32)                                  # (9, C)

    # (T, B, C) -> (B, T, C) so each grid step gets one contiguous batch slab.
    x_btc = jnp.transpose(x_tbc, (1, 0, 2))

    tok_spec = pl.BlockSpec((None, T, C), lambda b: (b, 0, 0))
    const = lambda shape: pl.BlockSpec(shape, lambda b: (0,) * len(shape))

    out_shapes = [jax.ShapeDtypeStruct((B, T, C), jnp.float32)]
    out_specs = [tok_spec]
    if return_adapter_features:
        out_shapes.append(jax.ShapeDtypeStruct((B, T, C), jnp.float32))
        out_specs.append(tok_spec)

    kernel = functools.partial(
        _encoder_layer_kernel, num_heads=num_heads, head_dim=head_dim)

    outs = pl.pallas_call(
        kernel,
        out_shape=tuple(out_shapes),
        grid_spec=pltpu.PrefetchScalarGridSpec(
            num_scalar_prefetch=0,
            grid=(B,),                         # one batch element per grid step
            in_specs=[
                tok_spec,                      # x (per-batch token slab)
                const((C, 3 * C)),             # fused wq|wk|wv  (VMEM-resident)
                const((C, C)),                 # wo
                const((C, F)),                 # fc1 w
                const((1, F)),                 # fc1 b
                const((F, C)),                 # fc2 w
                const((9, C)),                 # packed biases + LN vectors
            ],
            out_specs=out_specs,
        ),
        compiler_params=pltpu.CompilerParams(
            dimension_semantics=("parallel",)),   # v7x: batches split over 2 TCs
    )(x_btc, w_qkv, wo, w1, b1, w2, vec)

    out_tbc = jnp.transpose(outs[0], (1, 0, 2))
    adapt_tbc = (jnp.transpose(outs[1], (1, 0, 2))
                 if return_adapter_features else None)
    return out_tbc, None, adapt_tbc


def _reference(x_tbc, params, *, num_heads):
    """Pure-JAX reference (same math, no Pallas)."""
    T, B, C = x_tbc.shape
    hd = C // num_heads
    x = jnp.transpose(x_tbc, (1, 0, 2))  # (B,T,C)

    def ln(v, g, b):
        mu = jnp.mean(v, -1, keepdims=True)
        var = jnp.mean((v - mu) ** 2, -1, keepdims=True)
        return (v - mu) * jax.lax.rsqrt(var + 1e-5) * g + b

    q = (x @ params["wq"] + params["bq"]) * (hd ** -0.5)
    k = x @ params["wk"] + params["bk"]
    v = x @ params["wv"] + params["bv"]
    q = q.reshape(B, T, num_heads, hd).transpose(0, 2, 1, 3)
    k = k.reshape(B, T, num_heads, hd).transpose(0, 2, 1, 3)
    v = v.reshape(B, T, num_heads, hd).transpose(0, 2, 1, 3)
    s = jnp.einsum("bhqd,bhkd->bhqk", q, k)
    p = jax.nn.softmax(s, axis=-1)
    a = jnp.einsum("bhqk,bhkd->bhqd", p, v).transpose(0, 2, 1, 3).reshape(B, T, C)
    a = a @ params["wo"] + params["bo"]
    x1 = ln(x + a, params["ln1_g"], params["ln1_b"])
    y = jnp.maximum(x1 @ params["w1"] + params["b1"], 0.0) @ params["w2"] + params["b2"]
    out = ln(x1 + y, params["ln2_g"], params["ln2_b"])
    return jnp.transpose(out, (1, 0, 2)), jnp.transpose(y, (1, 0, 2))


def make_params(key, C, F):
    ks = jax.random.split(key, 12)
    def lin(k, fan_in, shape):
        return (jax.random.normal(k, shape, jnp.float32) / jnp.sqrt(fan_in)).astype(jnp.float32)
    return {
        "wq": lin(ks[0], C, (C, C)), "bq": lin(ks[1], C, (1, C)),
        "wk": lin(ks[2], C, (C, C)), "bk": lin(ks[3], C, (1, C)),
        "wv": lin(ks[4], C, (C, C)), "bv": lin(ks[5], C, (1, C)),
        "wo": lin(ks[6], C, (C, C)), "bo": lin(ks[7], C, (1, C)),
        "ln1_g": jnp.ones((1, C), jnp.float32), "ln1_b": jnp.zeros((1, C), jnp.float32),
        "w1": lin(ks[8], C, (C, F)), "b1": lin(ks[9], C, (1, F)),
        "w2": lin(ks[10], F, (F, C)), "b2": lin(ks[11], F, (1, C)),
        "ln2_g": jnp.ones((1, C), jnp.float32), "ln2_b": jnp.zeros((1, C), jnp.float32),
    }


if __name__ == "__main__":
    key = jax.random.PRNGKey(0)
    k_x, k_p = jax.random.split(key)

    # Small shapes consistent with the module: seq T=8, batch B=2, embed C=32,
    # heads=4, ffn F=64.
    T, B, C, H, F = 8, 2, 32, 4, 64
    x = jax.random.normal(k_x, (T, B, C), jnp.float32)
    params = make_params(k_p, C, F)

    ref_out, ref_adapt = _reference(x, params, num_heads=H)

    # --- f32 compute path ---
    out, attn, adapt = transformer_ada_layer(x, params, num_heads=H)
    out = jax.block_until_ready(out)
    adapt = jax.block_until_ready(adapt)
    # Tolerance covers the TPU MXU's default reduced-precision f32 (bf16-pass)
    # matmul behaviour of both the kernel and the XLA reference.
    assert jnp.allclose(out, ref_out, atol=3e-2, rtol=3e-2), "output mismatch (f32 path)"
    assert jnp.allclose(adapt, ref_adapt, atol=3e-2, rtol=3e-2), "adapter-features mismatch (f32 path)"

    # --- bf16 weights / bf16 MXU operands (f32 accumulation, f32 LN/softmax) ---
    out_bf, _, adapt_bf = transformer_ada_layer(
        x, params, num_heads=H, compute_dtype=jnp.bfloat16)
    out_bf = jax.block_until_ready(out_bf)
    adapt_bf = jax.block_until_ready(adapt_bf)
    assert jnp.allclose(out_bf, ref_out, atol=1e-1, rtol=1e-1), "output mismatch (bf16 path)"
    assert jnp.allclose(adapt_bf, ref_adapt, atol=1e-1, rtol=1e-1), "adapter-features mismatch (bf16 path)"

    print("KERNEL_OK")
</pallas_src>

<mosaic_0001>
module attributes {stable_mosaic.version = 11 : i64} {
  func.func @_encoder_layer_kernel(%arg0: i32, %arg1: memref<1x8x32xf32, #tpu.memory_space<vmem>>, %arg2: memref<32x96xf32, #tpu.memory_space<vmem>>, %arg3: memref<32x32xf32, #tpu.memory_space<vmem>>, %arg4: memref<32x64xf32, #tpu.memory_space<vmem>>, %arg5: memref<1x64xf32, #tpu.memory_space<vmem>>, %arg6: memref<64x32xf32, #tpu.memory_space<vmem>>, %arg7: memref<9x32xf32, #tpu.memory_space<vmem>>, %arg8: memref<1x8x32xf32, #tpu.memory_space<vmem>>, %arg9: memref<1x8x32xf32, #tpu.memory_space<vmem>>) attributes {dimension_semantics = [#tpu.dimension_semantics<parallel>], iteration_bounds = array<i64: 2>, scalar_prefetch = 0 : i64, scratch_operands = 0 : i64, tpu.core_type = #tpu.core_type<tc>, window_params = [{transform_indices = @transform_0, window_bounds = array<i64: 1, 8, 32>}, {pipeline_mode = #tpu.pipeline_mode<synchronous>, transform_indices = @transform_1, window_bounds = array<i64: 32, 96>}, {pipeline_mode = #tpu.pipeline_mode<synchronous>, transform_indices = @transform_2, window_bounds = array<i64: 32, 32>}, {pipeline_mode = #tpu.pipeline_mode<synchronous>, transform_indices = @transform_3, window_bounds = array<i64: 32, 64>}, {pipeline_mode = #tpu.pipeline_mode<synchronous>, transform_indices = @transform_4, window_bounds = array<i64: 1, 64>}, {pipeline_mode = #tpu.pipeline_mode<synchronous>, transform_indices = @transform_5, window_bounds = array<i64: 64, 32>}, {pipeline_mode = #tpu.pipeline_mode<synchronous>, transform_indices = @transform_6, window_bounds = array<i64: 9, 32>}, {transform_indices = @transform_7, window_bounds = array<i64: 1, 8, 32>}, {transform_indices = @transform_8, window_bounds = array<i64: 1, 8, 32>}]} {
    %c0 = arith.constant 0 : index
    %c0_0 = arith.constant 0 : index
    %c0_1 = arith.constant 0 : index
    %0 = vector.load %arg1[%c0, %c0_0, %c0_1] : memref<1x8x32xf32, #tpu.memory_space<vmem>>, vector<1x8x32xf32>
    %1 = vector.shape_cast %0 : vector<1x8x32xf32> to vector<8x32xf32>
    %c0_2 = arith.constant 0 : index
    %c0_3 = arith.constant 0 : index
    %2 = vector.load %arg2[%c0_2, %c0_3] : memref<32x96xf32, #tpu.memory_space<vmem>>, vector<32x96xf32>
    %cst = arith.constant dense<0.000000e+00> : vector<8x96xf32>
    %3 = tpu.matmul %1, %2, %cst {dimension_numbers = #tpu.dot_dimension_numbers<[1], [0], [0], [1], [0, 0, 1, 1], [], []>} : vector<8x32xf32>, vector<32x96xf32>, vector<8x96xf32> -> vector<8x96xf32>
    %4 = vector.extract_strided_slice %3 {offsets = [0, 0], sizes = [8, 32], strides = [1, 1]} : vector<8x96xf32> to vector<8x32xf32>
    %c0_4 = arith.constant 0 : index
    %c0_5 = arith.constant 0 : index
    %5 = vector.load %arg7[%c0_4, %c0_5] : memref<9x32xf32, #tpu.memory_space<vmem>>, vector<1x32xf32>
    %6 = vector.broadcast %5 : vector<1x32xf32> to vector<8x32xf32>
    %7 = arith.addf %4, %6 : vector<8x32xf32>
    %cst_6 = arith.constant 0.353553385 : f32
    %8 = vector.broadcast %cst_6 : f32 to vector<8x32xf32>
    %9 = arith.mulf %7, %8 : vector<8x32xf32>
    %10 = vector.extract_strided_slice %3 {offsets = [0, 32], sizes = [8, 32], strides = [1, 1]} : vector<8x96xf32> to vector<8x32xf32>
    %c1 = arith.constant 1 : index
    %c0_7 = arith.constant 0 : index
    %11 = vector.load %arg7[%c1, %c0_7] : memref<9x32xf32, #tpu.memory_space<vmem>>, vector<1x32xf32>
    %12 = vector.broadcast %11 : vector<1x32xf32> to vector<8x32xf32>
    %13 = arith.addf %10, %12 : vector<8x32xf32>
    %14 = vector.extract_strided_slice %3 {offsets = [0, 64], sizes = [8, 32], strides = [1, 1]} : vector<8x96xf32> to vector<8x32xf32>
    %c2 = arith.constant 2 : index
    %c0_8 = arith.constant 0 : index
    %15 = vector.load %arg7[%c2, %c0_8] : memref<9x32xf32, #tpu.memory_space<vmem>>, vector<1x32xf32>
    %16 = vector.broadcast %15 : vector<1x32xf32> to vector<8x32xf32>
    %17 = arith.addf %14, %16 : vector<8x32xf32>
    %18 = vector.shape_cast %9 : vector<8x32xf32> to vector<8x4x8xf32>
    %19 = tpu.transpose %18, [1, 0, 2] : vector<8x4x8xf32> -> vector<4x8x8xf32>
    %20 = vector.shape_cast %13 : vector<8x32xf32> to vector<8x4x8xf32>
    %21 = tpu.transpose %20, [1, 0, 2] : vector<8x4x8xf32> -> vector<4x8x8xf32>
    %22 = vector.shape_cast %17 : vector<8x32xf32> to vector<8x4x8xf32>
    %23 = tpu.transpose %22, [1, 0, 2] : vector<8x4x8xf32> -> vector<4x8x8xf32>
    "tpu.trace_start"() <{level = 10 : i32, message = "hqd,hkd->hqk"}> : () -> ()
    %cst_9 = arith.constant dense<0.000000e+00> : vector<4x8x8xf32>
    %24 = tpu.matmul %19, %21, %cst_9 {dimension_numbers = #tpu.dot_dimension_numbers<[2], [2], [1], [1], [0, 0, 0, 1, 1, 1], [0], [0]>} : vector<4x8x8xf32>, vector<4x8x8xf32>, vector<4x8x8xf32> -> vector<4x8x8xf32>
    "tpu.trace_stop"() : () -> ()
    %cst_10 = arith.constant dense<0xFF800000> : vector<4x8xf32>
    %25 = vector.multi_reduction <maximumf>, %24, %cst_10 [2] : vector<4x8x8xf32> to vector<4x8xf32>
    %26 = vector.shape_cast %25 : vector<4x8xf32> to vector<4x8x1xf32>
    %27 = vector.broadcast %26 : vector<4x8x1xf32> to vector<4x8x8xf32>
    %28 = arith.subf %24, %27 : vector<4x8x8xf32>
    %29 = math.exp %28 : vector<4x8x8xf32>
    %cst_11 = arith.constant dense<0.000000e+00> : vector<4x8xf32>
    %30 = vector.multi_reduction <add>, %29, %cst_11 [2] : vector<4x8x8xf32> to vector<4x8xf32>
    %31 = vector.shape_cast %30 : vector<4x8xf32> to vector<4x8x1xf32>
    %32 = vector.broadcast %31 : vector<4x8x1xf32> to vector<4x8x8xf32>
    %33 = arith.divf %29, %32 : vector<4x8x8xf32>
    "tpu.trace_start"() <{level = 10 : i32, message = "hqk,hkd->hqd"}> : () -> ()
    %cst_12 = arith.constant dense<0.000000e+00> : vector<4x8x8xf32>
    %34 = tpu.matmul %33, %23, %cst_12 {dimension_numbers = #tpu.dot_dimension_numbers<[2], [1], [1], [2], [0, 0, 0, 1, 1, 2], [0], [0]>} : vector<4x8x8xf32>, vector<4x8x8xf32>, vector<4x8x8xf32> -> vector<4x8x8xf32>
    "tpu.trace_stop"() : () -> ()
    %35 = tpu.transpose %34, [1, 0, 2] : vector<4x8x8xf32> -> vector<8x4x8xf32>
    %36 = vector.shape_cast %35 : vector<8x4x8xf32> to vector<8x32xf32>
    %c0_13 = arith.constant 0 : index
    %c0_14 = arith.constant 0 : index
    %37 = vector.load %arg3[%c0_13, %c0_14] : memref<32x32xf32, #tpu.memory_space<vmem>>, vector<32x32xf32>
    %cst_15 = arith.constant dense<0.000000e+00> : vector<8x32xf32>
    %38 = tpu.matmul %36, %37, %cst_15 {dimension_numbers = #tpu.dot_dimension_numbers<[1], [0], [0], [1], [0, 0, 1, 1], [], []>} : vector<8x32xf32>, vector<32x32xf32>, vector<8x32xf32> -> vector<8x32xf32>
    %c3 = arith.constant 3 : index
    %c0_16 = arith.constant 0 : index
    %39 = vector.load %arg7[%c3, %c0_16] : memref<9x32xf32, #tpu.memory_space<vmem>>, vector<1x32xf32>
    %40 = vector.broadcast %39 : vector<1x32xf32> to vector<8x32xf32>
    %41 = arith.addf %38, %40 : vector<8x32xf32>
    %42 = arith.addf %1, %41 : vector<8x32xf32>
    %c5 = arith.constant 5 : index
    %c0_17 = arith.constant 0 : index
    %43 = vector.load %arg7[%c5, %c0_17] : memref<9x32xf32, #tpu.memory_space<vmem>>, vector<1x32xf32>
    %c6 = arith.constant 6 : index
    %c0_18 = arith.constant 0 : index
    %44 = vector.load %arg7[%c6, %c0_18] : memref<9x32xf32, #tpu.memory_space<vmem>>, vector<1x32xf32>
    %cst_19 = arith.constant dense<0.000000e+00> : vector<8xf32>
    %45 = vector.multi_reduction <add>, %42, %cst_19 [1] : vector<8x32xf32> to vector<8xf32>
    %46 = vector.shape_cast %45 : vector<8xf32> to vector<8x1xf32>
    %cst_20 = arith.constant 3.200000e+01 : f32
    %47 = vector.broadcast %cst_20 : f32 to vector<8x1xf32>
    %48 = arith.divf %46, %47 : vector<8x1xf32>
    %49 = vector.broadcast %48 : vector<8x1xf32> to vector<8x32xf32>
    %50 = arith.subf %42, %49 : vector<8x32xf32>
    %51 = arith.mulf %50, %50 : vector<8x32xf32>
    %cst_21 = arith.constant dense<0.000000e+00> : vector<8xf32>
    %52 = vector.multi_reduction <add>, %51, %cst_21 [1] : vector<8x32xf32> to vector<8xf32>
    %53 = vector.shape_cast %52 : vector<8xf32> to vector<8x1xf32>
    %cst_22 = arith.constant 3.200000e+01 : f32
    %54 = vector.broadcast %cst_22 : f32 to vector<8x1xf32>
    %55 = arith.divf %53, %54 : vector<8x1xf32>
    %56 = vector.broadcast %48 : vector<8x1xf32> to vector<8x32xf32>
    %57 = arith.subf %42, %56 : vector<8x32xf32>
    %cst_23 = arith.constant 9.99999974E-6 : f32
    %58 = vector.broadcast %cst_23 : f32 to vector<8x1xf32>
    %59 = arith.addf %55, %58 : vector<8x1xf32>
    %60 = math.rsqrt %59 : vector<8x1xf32>
    %61 = vector.broadcast %60 : vector<8x1xf32> to vector<8x32xf32>
    %62 = arith.mulf %57, %61 : vector<8x32xf32>
    %63 = vector.broadcast %43 : vector<1x32xf32> to vector<8x32xf32>
    %64 = arith.mulf %62, %63 : vector<8x32xf32>
    %65 = vector.broadcast %44 : vector<1x32xf32> to vector<8x32xf32>
    %66 = arith.addf %64, %65 : vector<8x32xf32>
    %c0_24 = arith.constant 0 : index
    %c0_25 = arith.constant 0 : index
    %67 = vector.load %arg4[%c0_24, %c0_25] : memref<32x64xf32, #tpu.memory_space<vmem>>, vector<32x64xf32>
    %cst_26 = arith.constant dense<0.000000e+00> : vector<8x64xf32>
    %68 = tpu.matmul %66, %67, %cst_26 {dimension_numbers = #tpu.dot_dimension_numbers<[1], [0], [0], [1], [0, 0, 1, 1], [], []>} : vector<8x32xf32>, vector<32x64xf32>, vector<8x64xf32> -> vector<8x64xf32>
    %c0_27 = arith.constant 0 : index
    %c0_28 = arith.constant 0 : index
    %69 = vector.load %arg5[%c0_27, %c0_28] : memref<1x64xf32, #tpu.memory_space<vmem>>, vector<1x64xf32>
    %70 = vector.broadcast %69 : vector<1x64xf32> to vector<8x64xf32>
    %71 = arith.addf %68, %70 : vector<8x64xf32>
    %cst_29 = arith.constant 0.000000e+00 : f32
    %72 = vector.broadcast %cst_29 : f32 to vector<8x64xf32>
    %73 = arith.maximumf %71, %72 : vector<8x64xf32>
    %c0_30 = arith.constant 0 : index
    %c0_31 = arith.constant 0 : index
    %74 = vector.load %arg6[%c0_30, %c0_31] : memref<64x32xf32, #tpu.memory_space<vmem>>, vector<64x32xf32>
    %cst_32 = arith.constant dense<0.000000e+00> : vector<8x32xf32>
    %75 = tpu.matmul %73, %74, %cst_32 {dimension_numbers = #tpu.dot_dimension_numbers<[1], [0], [0], [1], [0, 0, 1, 1], [], []>} : vector<8x64xf32>, vector<64x32xf32>, vector<8x32xf32> -> vector<8x32xf32>
    %c4 = arith.constant 4 : index
    %c0_33 = arith.constant 0 : index
    %76 = vector.load %arg7[%c4, %c0_33] : memref<9x32xf32, #tpu.memory_space<vmem>>, vector<1x32xf32>
    %77 = vector.broadcast %76 : vector<1x32xf32> to vector<8x32xf32>
    %78 = arith.addf %75, %77 : vector<8x32xf32>
    %c0_34 = arith.constant 0 : index
    %c0_35 = arith.constant 0 : index
    %c0_36 = arith.constant 0 : index
    %79 = vector.load %arg9[%c0_34, %c0_35, %c0_36] : memref<1x8x32xf32, #tpu.memory_space<vmem>>, vector<1x8x32xf32>
    %80 = vector.shape_cast %79 : vector<1x8x32xf32> to vector<8x32xf32>
    %81 = vector.shape_cast %78 : vector<8x32xf32> to vector<1x8x32xf32>
    tpu.vector_store %arg9[%c0_34, %c0_35, %c0_36], %81 {strides = array<i32>} : memref<1x8x32xf32, #tpu.memory_space<vmem>>, vector<1x8x32xf32>,
    %82 = arith.addf %66, %78 : vector<8x32xf32>
    %c7 = arith.constant 7 : index
    %c0_37 = arith.constant 0 : index
    %83 = vector.load %arg7[%c7, %c0_37] : memref<9x32xf32, #tpu.memory_space<vmem>>, vector<1x32xf32>
    %c8 = arith.constant 8 : index
    %c0_38 = arith.constant 0 : index
    %84 = vector.load %arg7[%c8, %c0_38] : memref<9x32xf32, #tpu.memory_space<vmem>>, vector<1x32xf32>
    %cst_39 = arith.constant dense<0.000000e+00> : vector<8xf32>
    %85 = vector.multi_reduction <add>, %82, %cst_39 [1] : vector<8x32xf32> to vector<8xf32>
    %86 = vector.shape_cast %85 : vector<8xf32> to vector<8x1xf32>
    %cst_40 = arith.constant 3.200000e+01 : f32
    %87 = vector.broadcast %cst_40 : f32 to vector<8x1xf32>
    %88 = arith.divf %86, %87 : vector<8x1xf32>
    %89 = vector.broadcast %88 : vector<8x1xf32> to vector<8x32xf32>
    %90 = arith.subf %82, %89 : vector<8x32xf32>
    %91 = arith.mulf %90, %90 : vector<8x32xf32>
    %cst_41 = arith.constant dense<0.000000e+00> : vector<8xf32>
    %92 = vector.multi_reduction <add>, %91, %cst_41 [1] : vector<8x32xf32> to vector<8xf32>
    %93 = vector.shape_cast %92 : vector<8xf32> to vector<8x1xf32>
    %cst_42 = arith.constant 3.200000e+01 : f32
    %94 = vector.broadcast %cst_42 : f32 to vector<8x1xf32>
    %95 = arith.divf %93, %94 : vector<8x1xf32>
    %96 = vector.broadcast %88 : vector<8x1xf32> to vector<8x32xf32>
    %97 = arith.subf %82, %96 : vector<8x32xf32>
    %cst_43 = arith.constant 9.99999974E-6 : f32
    %98 = vector.broadcast %cst_43 : f32 to vector<8x1xf32>
    %99 = arith.addf %95, %98 : vector<8x1xf32>
    %100 = math.rsqrt %99 : vector<8x1xf32>
    %101 = vector.broadcast %100 : vector<8x1xf32> to vector<8x32xf32>
    %102 = arith.mulf %97, %101 : vector<8x32xf32>
    %103 = vector.broadcast %83 : vector<1x32xf32> to vector<8x32xf32>
    %104 = arith.mulf %102, %103 : vector<8x32xf32>
    %105 = vector.broadcast %84 : vector<1x32xf32> to vector<8x32xf32>
    %106 = arith.addf %104, %105 : vector<8x32xf32>
    %c0_44 = arith.constant 0 : index
    %c0_45 = arith.constant 0 : index
    %c0_46 = arith.constant 0 : index
    %107 = vector.load %arg8[%c0_44, %c0_45, %c0_46] : memref<1x8x32xf32, #tpu.memory_space<vmem>>, vector<1x8x32xf32>
    %108 = vector.shape_cast %107 : vector<1x8x32xf32> to vector<8x32xf32>
    %109 = vector.shape_cast %106 : vector<8x32xf32> to vector<1x8x32xf32>
    tpu.vector_store %arg8[%c0_44, %c0_45, %c0_46], %109 {strides = array<i32>} : memref<1x8x32xf32, #tpu.memory_space<vmem>>, vector<1x8x32xf32>,
    return
  }
  func.func @transform_0(%arg0: i32) -> (i32, i32, i32) {
    %c0_i32 = arith.constant 0 : i32
    %c0_i32_0 = arith.constant 0 : i32
    %c0_i32_1 = arith.constant 0 : i32
    return %arg0, %c0_i32, %c0_i32_0 : i32, i32, i32
  }
  func.func @transform_1(%arg0: i32) -> (i32, i32) {
    %c0_i32 = arith.constant 0 : i32
    %c0_i32_0 = arith.constant 0 : i32
    %c0_i32_1 = arith.constant 0 : i32
    return %c0_i32, %c0_i32_0 : i32, i32
  }
  func.func @transform_2(%arg0: i32) -> (i32, i32) {
    %c0_i32 = arith.constant 0 : i32
    %c0_i32_0 = arith.constant 0 : i32
    %c0_i32_1 = arith.constant 0 : i32
    return %c0_i32, %c0_i32_0 : i32, i32
  }
  func.func @transform_3(%arg0: i32) -> (i32, i32) {
    %c0_i32 = arith.constant 0 : i32
    %c0_i32_0 = arith.constant 0 : i32
    %c0_i32_1 = arith.constant 0 : i32
    return %c0_i32, %c0_i32_0 : i32, i32
  }
  func.func @transform_4(%arg0: i32) -> (i32, i32) {
    %c0_i32 = arith.constant 0 : i32
    %c0_i32_0 = arith.constant 0 : i32
    %c0_i32_1 = arith.constant 0 : i32
    return %c0_i32, %c0_i32_0 : i32, i32
  }
  func.func @transform_5(%arg0: i32) -> (i32, i32) {
    %c0_i32 = arith.constant 0 : i32
    %c0_i32_0 = arith.constant 0 : i32
    %c0_i32_1 = arith.constant 0 : i32
    return %c0_i32, %c0_i32_0 : i32, i32
  }
  func.func @transform_6(%arg0: i32) -> (i32, i32) {
    %c0_i32 = arith.constant 0 : i32
    %c0_i32_0 = arith.constant 0 : i32
    %c0_i32_1 = arith.constant 0 : i32
    return %c0_i32, %c0_i32_0 : i32, i32
  }
  func.func @transform_7(%arg0: i32) -> (i32, i32, i32) {
    %c0_i32 = arith.constant 0 : i32
    %c0_i32_0 = arith.constant 0 : i32
    %c0_i32_1 = arith.constant 0 : i32
    return %arg0, %c0_i32, %c0_i32_0 : i32, i32, i32
  }
  func.func @transform_8(%arg0: i32) -> (i32, i32, i32) {
    %c0_i32 = arith.constant 0 : i32
    %c0_i32_0 = arith.constant 0 : i32
    %c0_i32_1 = arith.constant 0 : i32
    return %arg0, %c0_i32, %c0_i32_0 : i32, i32, i32
  }
}

</mosaic_0001>

<llo_original>
// kernel: tpu_custom_call.1
$region0: #{tpu_custom_call.1}
  #allocation0 [shape = 'u32[]', space=smem, size = 0x4, offset = 0x4, fixed_abs, tag = 'smem constant byte address 0x4 - core index']
  #allocation1 [shape = 'u32[144,128]{1,0:T(1,128)}', space=vmem, size = 0x12000, scoped, tag = 'internal scratch']
  %s0 = inlined_call_operand.hbm [shape: f32[2,8,32], index: 0, kind: input, shape index: {}]
  %s1 = inlined_call_operand.vmem [shape: f32[32,96], index: 1, kind: input, shape index: {}]
  %s2 = inlined_call_operand.vmem [shape: f32[32,32], index: 2, kind: input, shape index: {}]
  %s3 = inlined_call_operand.vmem [shape: f32[32,64], index: 3, kind: input, shape index: {}]
  %s4 = inlined_call_operand.vmem [shape: f32[1,64], index: 4, kind: input, shape index: {}]
  %s5 = inlined_call_operand.vmem [shape: f32[64,32], index: 5, kind: input, shape index: {}]
  %s6 = inlined_call_operand.hbm [shape: f32[9,32], index: 6, kind: input, shape index: {}]
  %s7 = inlined_call_operand.hbm [shape: f32[2,8,32], index: 7, kind: output, shape index: {0}]
  %s8 = inlined_call_operand.hbm [shape: f32[2,8,32], index: 8, kind: output, shape index: {1}]
  %9 = xla_tuple %s7, %s8
  %s10 = sld [smem:[#allocation0]]
  $region77: #{tpu_custom_call.1} parent=0
    _
  %s12 = ssub.s32 1, %s10
  %s13 = scalar_select 0, %s12, %s10
  $region1: #{tpu_custom_call.1} parent=0
    #allocation2 [shape = 'u8[8192]{0}', space=vmem, size = 0x2000, scoped, tag = 'input window, operand 0']
    #allocation3 [shape = 's32[2]{0}', space=sflag, size = 0x8, scoped, tag = 'scoped memory for tpu_custom_call.1']
    #allocation4 [shape = 's32[2]{0}', space=sflag, size = 0x8, scoped, tag = 'scoped memory for tpu_custom_call.1']
    #allocation5 [shape = 'u8[8192]{0}', space=vmem, size = 0x2000, scoped, tag = 'input window, operand 6, single buffered']
    #allocation6 [shape = 's32[1]{0}', space=sflag, size = 0x4, scoped, tag = 'scoped memory for tpu_custom_call.1']
    #allocation7 [shape = 'u8[8192]{0}', space=vmem, size = 0x2000, scoped, tag = 'output window, operand 0']
    #allocation8 [shape = 'u8[8192]{0}', space=vmem, size = 0x2000, scoped, tag = 'output window, operand 1']
    #allocation9 [shape = 's32[2]{0}', space=sflag, size = 0x8, scoped, tag = 'scoped memory for tpu_custom_call.1']
    %14 = vsyncpa [#allocation3], 0
    %s15 = scalar_lea.sflag [#allocation3], 1
    %16 = vsyncpa %s15, 0
    %17 = vsyncpa [#allocation6], 0
    %18 = vsyncpa [#allocation4], 0
    %s19 = scalar_lea.sflag [#allocation4], 1
    %20 = vsyncpa %s19, 0
    %21 = vsyncpa [#allocation9], 0
    %s22 = scalar_lea.sflag [#allocation9], 1
    %23 = vsyncpa %s22, 0
    loop: start=0, step=1, limit=4
    $region2: #{tpu_custom_call.1} parent=1 // loop_pre_header
      _
    $region3: #{tpu_custom_call.1} parent=1 // loop_header
      %s25 = sphi 0, %s29
      %p26 = scmp.ge.s32.totalorder %s25, 4
      %s35 = sphi 0, %s37
      %s38 = sphi 0, %s35
      %s39 = sphi 0, %s38
      %s55 = sphi 0, %s39
      %s59 = sphi 0, %s59
      %s61 = sphi 0, %s59
      %s62 = sphi 0, %s61
      %s76 = sphi 0, %s62
      %s80 = sphi 0, %s80
      %s82 = sphi 0, %s80
      %s83 = sphi 0, %s82
      %s97 = sphi 0, %s83
      %s101 = sphi 0, %s101
      %s103 = sphi 0, %s101
      %s104 = sphi 0, %s103
      %s118 = sphi 0, %s104
      %s122 = sphi 0, %s122
      %s124 = sphi 0, %s122
      %s125 = sphi 0, %s124
      %s139 = sphi 0, %s125
      %s143 = sphi 0, %s143
      %s145 = sphi 0, %s143
      %s146 = sphi 0, %s145
      %s160 = sphi 0, %s146
      %s164 = sphi 0, %s164
      %s166 = sphi 0, %s164
      %s167 = sphi 0, %s166
      %s181 = sphi 0, %s167
      %s187 = sphi 0, %s189
      %s190 = sphi 0, %s187
      %s191 = sphi 0, %s190
      %s207 = sphi 0, %s191
      %s213 = sphi 0, %s215
      %s216 = sphi 0, %s213
      %s217 = sphi 0, %s216
      %s233 = sphi 0, %s217
    $region4: #{tpu_custom_call.1} parent=1 // loop_header_branch
      %28 = sbr.rel (%p26) target = $region8
    $region5: #{tpu_custom_call.1} parent=1 // loop_body
      %s30 = ssub.s32 %s25, 1
      %s31 = ssub.s32 %s25, 2
      %s32 = sadd.s32 %s25, 1
      %s33 = ssub.s32 %s25, %s32
      %p34 = scmp.eq.s32.totalorder %s33, 0
      %s36 = sadd.s32 %s35, 1
      %s37 = scalar_select %p34, %s35, %s36
      %p40 = pneg %p34
      %p41 = scmp.eq.s32.totalorder %s25, 1
      %p42 = por %p40, %p41
      %p43 = scmp.ne.s32.totalorder %s35, %s38
      %p44 = scmp.eq.s32.totalorder %s25, 0
      %p45 = por %p43, %p44
      %p46 = scmp.ne.s32.totalorder %s35, %s38
      %p47 = scmp.eq.s32.totalorder %s30, 1
      %p48 = por %p46, %p47
      %p49 = scmp.ne.s32.totalorder %s38, %s39
      %p50 = scmp.eq.s32.totalorder %s30, 0
      %p51 = por %p49, %p50
      %p52 = scmp.ne.s32.totalorder %s38, %s39
      %p53 = scmp.eq.s32.totalorder %s31, 1
      %p54 = por %p52, %p53
      %p56 = scmp.ne.s32.totalorder %s39, %s55
      %p57 = scmp.eq.s32.totalorder %s31, 0
      %p58 = por %p56, %p57
      %s60 = sadd.s32 %s59, 1
      %p63 = scmp.eq.s32.totalorder %s25, 1
      %p64 = scmp.ne.s32.totalorder %s59, %s61
      %p65 = scmp.eq.s32.totalorder %s25, 0
      %p66 = por %p64, %p65
      %p67 = scmp.ne.s32.totalorder %s59, %s61
      %p68 = scmp.eq.s32.totalorder %s30, 1
      %p69 = por %p67, %p68
      %p70 = scmp.ne.s32.totalorder %s61, %s62
      %p71 = scmp.eq.s32.totalorder %s30, 0
      %p72 = por %p70, %p71
      %p73 = scmp.ne.s32.totalorder %s61, %s62
      %p74 = scmp.eq.s32.totalorder %s31, 1
      %p75 = por %p73, %p74
      %p77 = scmp.ne.s32.totalorder %s62, %s76
      %p78 = scmp.eq.s32.totalorder %s31, 0
      %p79 = por %p77, %p78
      %s81 = sadd.s32 %s80, 1
      %p84 = scmp.eq.s32.totalorder %s25, 1
      %p85 = scmp.ne.s32.totalorder %s80, %s82
      %p86 = scmp.eq.s32.totalorder %s25, 0
      %p87 = por %p85, %p86
      %p88 = scmp.ne.s32.totalorder %s80, %s82
      %p89 = scmp.eq.s32.totalorder %s30, 1
      %p90 = por %p88, %p89
      %p91 = scmp.ne.s32.totalorder %s82, %s83
      %p92 = scmp.eq.s32.totalorder %s30, 0
      %p93 = por %p91, %p92
      %p94 = scmp.ne.s32.totalorder %s82, %s83
      %p95 = scmp.eq.s32.totalorder %s31, 1
      %p96 = por %p94, %p95
      %p98 = scmp.ne.s32.totalorder %s83, %s97
      %p99 = scmp.eq.s32.totalorder %s31, 0
      %p100 = por %p98, %p99
      %s102 = sadd.s32 %s101, 1
      %p105 = scmp.eq.s32.totalorder %s25, 1
      %p106 = scmp.ne.s32.totalorder %s101, %s103
      %p107 = scmp.eq.s32.totalorder %s25, 0
      %p108 = por %p106, %p107
      %p109 = scmp.ne.s32.totalorder %s101, %s103
      %p110 = scmp.eq.s32.totalorder %s30, 1
      %p111 = por %p109, %p110
      %p112 = scmp.ne.s32.totalorder %s103, %s104
      %p113 = scmp.eq.s32.totalorder %s30, 0
      %p114 = por %p112, %p113
      %p115 = scmp.ne.s32.totalorder %s103, %s104
      %p116 = scmp.eq.s32.totalorder %s31, 1
      %p117 = por %p115, %p116
      %p119 = scmp.ne.s32.totalorder %s104, %s118
      %p120 = scmp.eq.s32.totalorder %s31, 0
      %p121 = por %p119, %p120
      %s123 = sadd.s32 %s122, 1
      %p126 = scmp.eq.s32.totalorder %s25, 1
      %p127 = scmp.ne.s32.totalorder %s122, %s124
      %p128 = scmp.eq.s32.totalorder %s25, 0
      %p129 = por %p127, %p128
      %p130 = scmp.ne.s32.totalorder %s122, %s124
      %p131 = scmp.eq.s32.totalorder %s30, 1
      %p132 = por %p130, %p131
      %p133 = scmp.ne.s32.totalorder %s124, %s125
      %p134 = scmp.eq.s32.totalorder %s30, 0
      %p135 = por %p133, %p134
      %p136 = scmp.ne.s32.totalorder %s124, %s125
      %p137 = scmp.eq.s32.totalorder %s31, 1
      %p138 = por %p136, %p137
      %p140 = scmp.ne.s32.totalorder %s125, %s139
      %p141 = scmp.eq.s32.totalorder %s31, 0
      %p142 = por %p140, %p141
      %s144 = sadd.s32 %s143, 1
      %p147 = scmp.eq.s32.totalorder %s25, 1
      %p148 = scmp.ne.s32.totalorder %s143, %s145
      %p149 = scmp.eq.s32.totalorder %s25, 0
      %p150 = por %p148, %p149
      %p151 = scmp.ne.s32.totalorder %s143, %s145
      %p152 = scmp.eq.s32.totalorder %s30, 1
      %p153 = por %p151, %p152
      %p154 = scmp.ne.s32.totalorder %s145, %s146
      %p155 = scmp.eq.s32.totalorder %s30, 0
      %p156 = por %p154, %p155
      %p157 = scmp.ne.s32.totalorder %s145, %s146
      %p158 = scmp.eq.s32.totalorder %s31, 1
      %p159 = por %p157, %p158
      %p161 = scmp.ne.s32.totalorder %s146, %s160
      %p162 = scmp.eq.s32.totalorder %s31, 0
      %p163 = por %p161, %p162
      %s165 = sadd.s32 %s164, 1
      %p168 = scmp.eq.s32.totalorder %s25, 1
      %p169 = scmp.ne.s32.totalorder %s164, %s166
      %p170 = scmp.eq.s32.totalorder %s25, 0
      %p171 = por %p169, %p170
      %p172 = scmp.ne.s32.totalorder %s164, %s166
      %p173 = scmp.eq.s32.totalorder %s30, 1
      %p174 = por %p172, %p173
      %p175 = scmp.ne.s32.totalorder %s166, %s167
      %p176 = scmp.eq.s32.totalorder %s30, 0
      %p177 = por %p175, %p176
      %p178 = scmp.ne.s32.totalorder %s166, %s167
      %p179 = scmp.eq.s32.totalorder %s31, 1
      %p180 = por %p178, %p179
      %p182 = scmp.ne.s32.totalorder %s167, %s181
      %p183 = scmp.eq.s32.totalorder %s31, 0
      %p184 = por %p182, %p183
      %s185 = ssub.s32 %s25, %s32
      %p186 = scmp.eq.s32.totalorder %s185, 0
      %s188 = sadd.s32 %s187, 1
      %s189 = scalar_select %p186, %s187, %s188
      %p192 = pneg %p186
      %p193 = scmp.eq.s32.totalorder %s25, 1
      %p194 = por %p192, %p193
      %p195 = scmp.ne.s32.totalorder %s187, %s190
      %p196 = scmp.eq.s32.totalorder %s25, 0
      %p197 = por %p195, %p196
      %p198 = scmp.ne.s32.totalorder %s187, %s190
      %p199 = scmp.eq.s32.totalorder %s30, 1
      %p200 = por %p198, %p199
      %p201 = scmp.ne.s32.totalorder %s190, %s191
      %p202 = scmp.eq.s32.totalorder %s30, 0
      %p203 = por %p201, %p202
      %p204 = scmp.ne.s32.totalorder %s190, %s191
      %p205 = scmp.eq.s32.totalorder %s31, 1
      %p206 = por %p204, %p205
      %p208 = scmp.ne.s32.totalorder %s191, %s207
      %p209 = scmp.eq.s32.totalorder %s31, 0
      %p210 = por %p208, %p209
      %s211 = ssub.s32 %s25, %s32
      %p212 = scmp.eq.s32.totalorder %s211, 0
      %s214 = sadd.s32 %s213, 1
      %s215 = scalar_select %p212, %s213, %s214
      %p218 = pneg %p212
      %p219 = scmp.eq.s32.totalorder %s25, 1
      %p220 = por %p218, %p219
      %p221 = scmp.ne.s32.totalorder %s213, %s216
      %p222 = scmp.eq.s32.totalorder %s25, 0
      %p223 = por %p221, %p222
      %p224 = scmp.ne.s32.totalorder %s213, %s216
      %p225 = scmp.eq.s32.totalorder %s30, 1
      %p226 = por %p224, %p225
      %p227 = scmp.ne.s32.totalorder %s216, %s217
      %p228 = scmp.eq.s32.totalorder %s30, 0
      %p229 = por %p227, %p228
      %p230 = scmp.ne.s32.totalorder %s216, %s217
      %p231 = scmp.eq.s32.totalorder %s31, 1
      %p232 = por %p230, %p231
      %p234 = scmp.ne.s32.totalorder %s217, %s233
      %p235 = scmp.eq.s32.totalorder %s31, 0
      %p236 = por %p234, %p235
      %p237 = scmp.le.s32.totalorder 1, %s25
      %p238 = scmp.lt.s32.totalorder %s25, 3
      %p239 = pnand %p237, %p238
      %p240 = pneg %p239
      // Predicated region
      $region9: #{tpu_custom_call.1} parent=5 // pred_check
        _
      $region10: #{tpu_custom_call.1} parent=5 // pred_check_branch
        %242 = sbr.rel (%p239) target = $region12
      $region11: #{tpu_custom_call.1} parent=5 // pred_region
        %s243 = ssub.s32 %s25, 1
        // Predicated region
        $region13: #{tpu_custom_call.1} parent=11 // pred_check
          %p244 = pneg %p72
        $region14: #{tpu_custom_call.1} parent=11 // pred_check_branch
          %246 = sbr.rel (%p244) target = $region16
        $region15: #{tpu_custom_call.1} parent=11 // pred_region
          _
        $region16: #{tpu_custom_call.1} parent=11 // pred_fallthru
          _
        // Predicated region
        $region17: #{tpu_custom_call.1} parent=11 // pred_check
          %p247 = pneg %p93
        $region18: #{tpu_custom_call.1} parent=11 // pred_check_branch
          %249 = sbr.rel (%p247) target = $region20
        $region19: #{tpu_custom_call.1} parent=11 // pred_region
          _
        $region20: #{tpu_custom_call.1} parent=11 // pred_fallthru
          _
        // Predicated region
        $region21: #{tpu_custom_call.1} parent=11 // pred_check
          %p250 = pneg %p114
        $region22: #{tpu_custom_call.1} parent=11 // pred_check_branch
          %252 = sbr.rel (%p250) target = $region24
        $region23: #{tpu_custom_call.1} parent=11 // pred_region
          _
        $region24: #{tpu_custom_call.1} parent=11 // pred_fallthru
          _
        // Predicated region
        $region25: #{tpu_custom_call.1} parent=11 // pred_check
          %p253 = pneg %p135
        $region26: #{tpu_custom_call.1} parent=11 // pred_check_branch
          %255 = sbr.rel (%p253) target = $region28
        $region27: #{tpu_custom_call.1} parent=11 // pred_region
          _
        $region28: #{tpu_custom_call.1} parent=11 // pred_fallthru
          _
        // Predicated region
        $region29: #{tpu_custom_call.1} parent=11 // pred_check
          %p256 = pneg %p156
        $region30: #{tpu_custom_call.1} parent=11 // pred_check_branch
          %258 = sbr.rel (%p256) target = $region32
        $region31: #{tpu_custom_call.1} parent=11 // pred_region
          _
        $region32: #{tpu_custom_call.1} parent=11 // pred_fallthru
          _
        // Predicated region
        $region33: #{tpu_custom_call.1} parent=11 // pred_check
          %p259 = pneg %p177
        $region34: #{tpu_custom_call.1} parent=11 // pred_check_branch
          %261 = sbr.rel (%p259) target = $region36
        $region35: #{tpu_custom_call.1} parent=11 // pred_region
          %s263 = ssub.s32 256, 256
          %264 = vsyncadd [#allocation6], %s263
          %s265 = sshll.u32 [#allocation5], 4
          %s266 = int_to_ptr.vmem [resolvable:$true] %s265
          %271 = dma.hbm_to_vmem [thread:$0]  %s6, 256, %s266, [#allocation6], 128, 128, 8
        $region36: #{tpu_custom_call.1} parent=11 // pred_fallthru
          _
      $region12: #{tpu_custom_call.1} parent=5 // pred_fallthru
        _
      %p272 = scmp.lt.s32.totalorder %s25, 2
      // Predicated region
      $region37: #{tpu_custom_call.1} parent=5 // pred_check
        %p273 = pneg %p272
      $region38: #{tpu_custom_call.1} parent=5 // pred_check_branch
        %275 = sbr.rel (%p273) target = $region40
      $region39: #{tpu_custom_call.1} parent=5 // pred_region
        // Predicated region
        $region41: #{tpu_custom_call.1} parent=39 // pred_check
          %p276 = pneg %p45
        $region42: #{tpu_custom_call.1} parent=39 // pred_check_branch
          %278 = sbr.rel (%p276) target = $region44
        $region43: #{tpu_custom_call.1} parent=39 // pred_region
          %s279 = sand.u32 %s35, 1
          %s280 = scalar_lea.sflag [#allocation3], %s279
          %s281 = sand.u32 %s35, 1
          %s282 = smul.addr %s281, 8
          %s283 = scalar_lea.vmem [#allocation2], %s282
          %s285 = ssub.s32 128, 128
          %286 = vsyncadd %s280, %s285
          %s287 = smul.addr %s25, 128
          %s288 = scalar_lea.hbm %s0, %s287
          %s290 = sshll.u32 %s283, 4
          %s291 = int_to_ptr.vmem [resolvable:$true] %s290
          %293 = dma.hbm_to_vmem [thread:$0]  %s288, 128, %s291, %s280
        $region44: #{tpu_custom_call.1} parent=39 // pred_fallthru
          _
      $region40: #{tpu_custom_call.1} parent=5 // pred_fallthru
        _
      %p294 = scmp.le.s32.totalorder 1, %s25
      %p295 = scmp.lt.s32.totalorder %s25, 3
      %p296 = pnand %p294, %p295
      %p297 = pneg %p296
      // Predicated region
      $region45: #{tpu_custom_call.1} parent=5 // pred_check
        _
      $region46: #{tpu_custom_call.1} parent=5 // pred_check_branch
        %299 = sbr.rel (%p296) target = $region48
      $region47: #{tpu_custom_call.1} parent=5 // pred_region
        %s300 = ssub.s32 %s25, 1
        %s301 = sand.u32 %s38, 1
        %s302 = scalar_lea.sflag [#allocation3], %s301
        %s303 = sand.u32 %s38, 1
        %s304 = smul.addr %s303, 8
        %s305 = scalar_lea.vmem [#allocation2], %s304
        // Predicated region
        $region49: #{tpu_custom_call.1} parent=47 // pred_check
          %p306 = pneg %p51
        $region50: #{tpu_custom_call.1} parent=47 // pred_check_branch
          %308 = sbr.rel (%p306) target = $region52
        $region51: #{tpu_custom_call.1} parent=47 // pred_region
          %309 = dma.done %s302, 128
        $region52: #{tpu_custom_call.1} parent=47 // pred_fallthru
          _
        // Predicated region
        $region53: #{tpu_custom_call.1} parent=47 // pred_check
          %p310 = pneg %p177
        $region54: #{tpu_custom_call.1} parent=47 // pred_check_branch
          %312 = sbr.rel (%p310) target = $region56
        $region55: #{tpu_custom_call.1} parent=47 // pred_region
          %313 = dma.done [#allocation6], 256
        $region56: #{tpu_custom_call.1} parent=47 // pred_fallthru
          _
        %s314 = sand.u32 %s38, 1
        %s315 = scalar_lea.sflag [#allocation3], %s314
        %s316 = sand.u32 %s38, 1
        %s317 = smul.addr %s316, 8
        %s318 = scalar_lea.vmem [#allocation2], %s317
        %p319 = pneg %p51
        %p320 = pneg %p48
        %p321 = pneg %p72
        %p322 = pneg %p69
        %p323 = pneg %p93
        %p324 = pneg %p90
        %p325 = pneg %p114
        %p326 = pneg %p111
        %p327 = pneg %p135
        %p328 = pneg %p132
        %p329 = pneg %p156
        %p330 = pneg %p153
        %p331 = pneg %p177
        %p332 = pneg %p174
        %p333 = pneg %p203
        %p334 = pneg %p200
        %s335 = sand.u32 %s190, 1
        %s336 = scalar_lea.sflag [#allocation4], %s335
        %s337 = sand.u32 %s190, 1
        %s338 = smul.addr %s337, 8
        %s339 = scalar_lea.vmem [#allocation7], %s338
        %p340 = pneg %p229
        %p341 = pneg %p226
        %s342 = sand.u32 %s216, 1
        %s343 = scalar_lea.sflag [#allocation9], %s342
        %s344 = sand.u32 %s216, 1
        %s345 = smul.addr %s344, 8
        %s346 = scalar_lea.vmem [#allocation8], %s345
        %v347 = vld [vmem:[%s305] sm:$0xff]
        %v348 = vld [vmem:[%s1] sm:$0xff]
        %v349 = vld [vmem:[%s1 + $0x8] sm:$0xff]
        %v350 = vld [vmem:[%s1 + $0x10] sm:$0xff]
        %v351 = vld [vmem:[%s1 + $0x18] sm:$0xff]
        %vm352 = vcmask 261120
        %v354 = vsel %vm352, %v347, 0
        %356 = vmatprep.subr.mxu0 0.0
        %357 = vmatpush1.msra.mxu0 0.0
        %358 = vmatprep.subr.mxu0 0.0
        %359 = vmatpush1.msra.mxu0 0.0
        %360 = vmatprep.subr.mxu0 0.0
        %361 = vmatpush1.msra.mxu0 0.0
        %362 = vmatprep.subr.mxu0 0.0
        %363 = vmatpush1.msra.mxu0 0.0
        %364 = vmatprep.subr.mxu0 0.0
        %365 = vmatpush1.msra.mxu0 0.0
        %366 = vmatprep.subr.mxu0 0.0
        %367 = vmatpush1.msra.mxu0 0.0
        %368 = vmatprep.subr.mxu0 0.0
        %369 = vmatpush1.msra.mxu0 0.0
        %370 = vmatprep.subr.mxu0 0.0
        %371 = vmatpush1.msra.mxu0 0.0
        %372 = vmatprep.subr.mxu0 0.0
        %373 = vmatpush1.msra.mxu0 0.0
        %374 = vmatprep.subr.mxu0 0.0
        %375 = vmatpush1.msra.mxu0 0.0
        %376 = vmatprep.subr.mxu0 0.0
        %377 = vmatpush1.msra.mxu0 0.0
        %378 = vmatprep.subr.mxu0 0.0
        %379 = vmatpush1.msra.mxu0 0.0
        %380 = vmatprep.subr.mxu0 0.0
        %381 = vmatpush1.msra.mxu0 %v351
        %382 = vmatprep.subr.mxu0 0.0
        %383 = vmatpush1.msra.mxu0 %v350
        %384 = vmatprep.subr.mxu0 0.0
        %385 = vmatpush1.msra.mxu0 %v349
        %386 = vmatprep.subr.mxu0 0.0
        %387 = vmatpush1.msra.mxu0 %v348
        %388 = vmatprep.subr.mxu0 0.0
        %389 = vmatpush2.msra.mxu0 0.0
        %390 = vmatprep.subr.mxu0 0.0
        %391 = vmatpush2.msra.mxu0 0.0
        %392 = vmatprep.subr.mxu0 0.0
        %393 = vmatpush2.msra.mxu0 0.0
        %394 = vmatprep.subr.mxu0 0.0
        %395 = vmatpush2.msra.mxu0 0.0
        %396 = vmatprep.subr.mxu0 0.0
        %397 = vmatpush2.msra.mxu0 0.0
        %398 = vmatprep.subr.mxu0 0.0
        %399 = vmatpush2.msra.mxu0 0.0
        %400 = vmatprep.subr.mxu0 0.0
        %401 = vmatpush2.msra.mxu0 0.0
        %402 = vmatprep.subr.mxu0 0.0
        %403 = vmatpush2.msra.mxu0 0.0
        %404 = vmatprep.subr.mxu0 0.0
        %405 = vmatpush2.msra.mxu0 0.0
        %406 = vmatprep.subr.mxu0 0.0
        %407 = vmatpush2.msra.mxu0 0.0
        %408 = vmatprep.subr.mxu0 0.0
        %409 = vmatpush2.msra.mxu0 0.0
        %410 = vmatprep.subr.mxu0 0.0
        %411 = vmatpush2.msra.mxu0 0.0
        %412 = vmatprep.subr.mxu0 0.0
        %413 = vmatpush2.msra.mxu0 0.0
        %414 = vmatprep.subr.mxu0 0.0
        %415 = vmatpush2.msra.mxu0 0.0
        %416 = vmatprep.subr.mxu0 0.0
        %417 = vmatpush2.msra.mxu0 0.0
        %418 = vmatprep.subr.mxu0 0.0
        %419 = vmatpush2.msra.mxu0 0.0
        %420 = vmatprep.mubr.f32.mxu0 0.0
        %421 = vmatmul.mubr.f32.gmra.mxu0 %v354
        %v422 = vpop.f32.mrf.mxu0
        %v423 = vadd.f32 0.0, %v422
        %v424 = vpop.f32.mrf.mxu0
        %425 = vdwg.mxu0
        %v426 = vld [vmem:[#allocation5] sm:$0x1]
        %v427 = vlaneseq
        %v428 = vshrl.u32 %v427, 7
        %v429 = vsub.s32 0, %v428
        %v430 = vrot.slane %v426, %v429
        %v431 = vadd.f32 %v423, %v430
        %v432 = vmul.f32 %v431, 0.35355338
        %v433 = vld [vmem:[#allocation5 + $0x1] sm:$0x1]
        %v434 = vlaneseq
        %v435 = vshrl.u32 %v434, 7
        %v436 = vsub.s32 0, %v435
        %v437 = vrot.slane %v433, %v436
        %439 = vrot.lane.b32.xlu0 %v437, 32
        %v440 = vpop.permute.xlu0 %439
        %v442 = vadd.f32 %v423, %v440
        %v443 = vld [vmem:[#allocation5 + $0x2] sm:$0x1]
        %v444 = vlaneseq
        %v445 = vshrl.u32 %v444, 7
        %v446 = vsub.s32 0, %v445
        %v447 = vrot.slane %v443, %v446
        %449 = vrot.lane.b32.xlu0 %v447, 64
        %v450 = vpop.permute.xlu0 %449
        %v452 = vadd.f32 %v423, %v450
        %454 = vrot.lane.b32.xlu0 %v432, 120
        %v455 = vpop.permute.xlu0 %454
        %457 = vrot.lane.b32.xlu0 %v432, 112
        %v458 = vpop.permute.xlu0 %457
        %460 = vrot.lane.b32.xlu0 %v432, 104
        %v461 = vpop.permute.xlu0 %460
        %v463 = vcombine.low %v432, %v458
        %v464 = vcombine.high %v432, %v458
        %v466 = vunpack.c.l.s4 1983009808
        %v467 = vunpack.c.0.s8 %v466
        %v468 = vlaneseq
        %v469 = vshrl.u32 %v468, 7
        %v470 = vsub.s32 %v467, %v469
        %v471 = vrot.slane %v463, %v470
        %v473 = vunpack.c.l.s4 1983009808
        %v474 = vunpack.c.0.s8 %v473
        %v475 = vlaneseq
        %v476 = vshrl.u32 %v475, 7
        %v477 = vsub.s32 %v474, %v476
        %v478 = vrot.slane %v464, %v477
        %v479 = vcombine.low %v455, %v461
        %v480 = vcombine.high %v455, %v461
        %v482 = vunpack.c.l.s4 1983009808
        %v483 = vunpack.c.0.s8 %v482
        %v484 = vlaneseq
        %v485 = vshrl.u32 %v484, 7
        %v486 = vsub.s32 %v483, %v485
        %v487 = vrot.slane %v479, %v486
        %v489 = vunpack.c.l.s4 1983009808
        %v490 = vunpack.c.0.s8 %v489
        %v491 = vlaneseq
        %v492 = vshrl.u32 %v491, 7
        %v493 = vsub.s32 %v490, %v492
        %v494 = vrot.slane %v480, %v493
        %v495 = vcombine.low %v471, %v487
        %v496 = vcombine.high %v471, %v487
        %v498 = vunpack.c.l.s4 1934713408
        %v499 = vunpack.c.0.s8 %v498
        %v500 = vlaneseq
        %v501 = vshrl.u32 %v500, 7
        %v502 = vsub.s32 %v499, %v501
        %v503 = vrot.slane %v495, %v502
        %v505 = vunpack.c.l.s4 1934713408
        %v506 = vunpack.c.0.s8 %v505
        %v507 = vlaneseq
        %v508 = vshrl.u32 %v507, 7
        %v509 = vsub.s32 %v506, %v508
        %v510 = vrot.slane %v496, %v509
        %v511 = vcombine.low %v478, %v494
        %v512 = vcombine.high %v478, %v494
        %v514 = vunpack.c.l.s4 1934713408
        %v515 = vunpack.c.0.s8 %v514
        %v516 = vlaneseq
        %v517 = vshrl.u32 %v516, 7
        %v518 = vsub.s32 %v515, %v517
        %v519 = vrot.slane %v511, %v518
        %v521 = vunpack.c.l.s4 1934713408
        %v522 = vunpack.c.0.s8 %v521
        %v523 = vlaneseq
        %v524 = vshrl.u32 %v523, 7
        %v525 = vsub.s32 %v522, %v524
        %v526 = vrot.slane %v512, %v525
        %v527 = vcombine.high %v503, 0.0
        %v528 = vcombine.high %v510, 0.0
        %v529 = vcombine.high %v519, 0.0
        %v530 = vcombine.high %v526, 0.0
        %v531 = vcombine.low %v503, %v510
        %v533 = vunpack.c.l.s4 1983009808
        %v534 = vunpack.c.0.s8 %v533
        %v535 = vlaneseq
        %v536 = vshrl.u32 %v535, 7
        %v537 = vsub.s32 %v534, %v536
        %v538 = vrot.slane %v531, %v537
        %v539 = vcombine.low %v527, %v528
        %v541 = vunpack.c.l.s4 1983009808
        %v542 = vunpack.c.0.s8 %v541
        %v543 = vlaneseq
        %v544 = vshrl.u32 %v543, 7
        %v545 = vsub.s32 %v542, %v544
        %v546 = vrot.slane %v539, %v545
        %v547 = vcombine.low %v519, %v526
        %v549 = vunpack.c.l.s4 1983009808
        %v550 = vunpack.c.0.s8 %v549
        %v551 = vlaneseq
        %v552 = vshrl.u32 %v551, 7
        %v553 = vsub.s32 %v550, %v552
        %v554 = vrot.slane %v547, %v553
        %v555 = vcombine.low %v529, %v530
        %v557 = vunpack.c.l.s4 1983009808
        %v558 = vunpack.c.0.s8 %v557
        %v559 = vlaneseq
        %v560 = vshrl.u32 %v559, 7
        %v561 = vsub.s32 %v558, %v560
        %v562 = vrot.slane %v555, %v561
        %v563 = vcombine.low %v538, %v546
        %v564 = vcombine.high %v538, %v546
        %v566 = vunpack.c.l.s4 1934713408
        %v567 = vunpack.c.0.s8 %v566
        %v568 = vlaneseq
        %v569 = vshrl.u32 %v568, 7
        %v570 = vsub.s32 %v567, %v569
        %v571 = vrot.slane %v563, %v570
        %v573 = vunpack.c.l.s4 1934713408
        %v574 = vunpack.c.0.s8 %v573
        %v575 = vlaneseq
        %v576 = vshrl.u32 %v575, 7
        %v577 = vsub.s32 %v574, %v576
        %v578 = vrot.slane %v564, %v577
        %v579 = vcombine.low %v554, %v562
        %v580 = vcombine.high %v554, %v562
        %v582 = vunpack.c.l.s4 1934713408
        %v583 = vunpack.c.0.s8 %v582
        %v584 = vlaneseq
        %v585 = vshrl.u32 %v584, 7
        %v586 = vsub.s32 %v583, %v585
        %v587 = vrot.slane %v579, %v586
        %v589 = vunpack.c.l.s4 1934713408
        %v590 = vunpack.c.0.s8 %v589
        %v591 = vlaneseq
        %v592 = vshrl.u32 %v591, 7
        %v593 = vsub.s32 %v590, %v592
        %v594 = vrot.slane %v580, %v593
        %v595 = vcombine.low %v571, %v587
        %v596 = vcombine.high %v571, %v587
        %v597 = vcombine.low %v578, %v594
        %v598 = vcombine.high %v578, %v594
        %600 = vrot.lane.b32.xlu0 %v442, 120
        %v601 = vpop.permute.xlu0 %600
        %602 = vrot.lane.b32.xlu0 %v442, 112
        %v603 = vpop.permute.xlu0 %602
        %604 = vrot.lane.b32.xlu0 %v442, 104
        %v605 = vpop.permute.xlu0 %604
        %606 = vrot.lane.b32.xlu0 %v442, 96
        %v607 = vpop.permute.xlu0 %606
        %608 = vrot.lane.b32.xlu0 %v601, 96
        %v609 = vpop.permute.xlu0 %608
        %610 = vrot.lane.b32.xlu0 %v603, 96
        %v611 = vpop.permute.xlu0 %610
        %612 = vrot.lane.b32.xlu0 %v605, 96
        %v613 = vpop.permute.xlu0 %612
        %v618 = vcombine.low %v607, %v611
        %v619 = vcombine.high %v607, %v611
        %v621 = vunpack.c.l.s4 1983009808
        %v622 = vunpack.c.0.s8 %v621
        %v623 = vlaneseq
        %v624 = vshrl.u32 %v623, 7
        %v625 = vsub.s32 %v622, %v624
        %v626 = vrot.slane %v618, %v625
        %v628 = vunpack.c.l.s4 1983009808
        %v629 = vunpack.c.0.s8 %v628
        %v630 = vlaneseq
        %v631 = vshrl.u32 %v630, 7
        %v632 = vsub.s32 %v629, %v631
        %v633 = vrot.slane %v619, %v632
        %v634 = vcombine.low %v609, %v613
        %v635 = vcombine.high %v609, %v613
        %v637 = vunpack.c.l.s4 1983009808
        %v638 = vunpack.c.0.s8 %v637
        %v639 = vlaneseq
        %v640 = vshrl.u32 %v639, 7
        %v641 = vsub.s32 %v638, %v640
        %v642 = vrot.slane %v634, %v641
        %v644 = vunpack.c.l.s4 1983009808
        %v645 = vunpack.c.0.s8 %v644
        %v646 = vlaneseq
        %v647 = vshrl.u32 %v646, 7
        %v648 = vsub.s32 %v645, %v647
        %v649 = vrot.slane %v635, %v648
        %v650 = vcombine.low %v626, %v642
        %v651 = vcombine.high %v626, %v642
        %v653 = vunpack.c.l.s4 1934713408
        %v654 = vunpack.c.0.s8 %v653
        %v655 = vlaneseq
        %v656 = vshrl.u32 %v655, 7
        %v657 = vsub.s32 %v654, %v656
        %v658 = vrot.slane %v650, %v657
        %v660 = vunpack.c.l.s4 1934713408
        %v661 = vunpack.c.0.s8 %v660
        %v662 = vlaneseq
        %v663 = vshrl.u32 %v662, 7
        %v664 = vsub.s32 %v661, %v663
        %v665 = vrot.slane %v651, %v664
        %v666 = vcombine.low %v633, %v649
        %v667 = vcombine.high %v633, %v649
        %v669 = vunpack.c.l.s4 1934713408
        %v670 = vunpack.c.0.s8 %v669
        %v671 = vlaneseq
        %v672 = vshrl.u32 %v671, 7
        %v673 = vsub.s32 %v670, %v672
        %v674 = vrot.slane %v666, %v673
        %v676 = vunpack.c.l.s4 1934713408
        %v677 = vunpack.c.0.s8 %v676
        %v678 = vlaneseq
        %v679 = vshrl.u32 %v678, 7
        %v680 = vsub.s32 %v677, %v679
        %v681 = vrot.slane %v667, %v680
        %v682 = vcombine.high %v658, 0.0
        %v683 = vcombine.high %v665, 0.0
        %v684 = vcombine.high %v674, 0.0
        %v685 = vcombine.high %v681, 0.0
        %v686 = vcombine.low %v658, %v665
        %v688 = vunpack.c.l.s4 1983009808
        %v689 = vunpack.c.0.s8 %v688
        %v690 = vlaneseq
        %v691 = vshrl.u32 %v690, 7
        %v692 = vsub.s32 %v689, %v691
        %v693 = vrot.slane %v686, %v692
        %v694 = vcombine.low %v682, %v683
        %v696 = vunpack.c.l.s4 1983009808
        %v697 = vunpack.c.0.s8 %v696
        %v698 = vlaneseq
        %v699 = vshrl.u32 %v698, 7
        %v700 = vsub.s32 %v697, %v699
        %v701 = vrot.slane %v694, %v700
        %v702 = vcombine.low %v674, %v681
        %v704 = vunpack.c.l.s4 1983009808
        %v705 = vunpack.c.0.s8 %v704
        %v706 = vlaneseq
        %v707 = vshrl.u32 %v706, 7
        %v708 = vsub.s32 %v705, %v707
        %v709 = vrot.slane %v702, %v708
        %v710 = vcombine.low %v684, %v685
        %v712 = vunpack.c.l.s4 1983009808
        %v713 = vunpack.c.0.s8 %v712
        %v714 = vlaneseq
        %v715 = vshrl.u32 %v714, 7
        %v716 = vsub.s32 %v713, %v715
        %v717 = vrot.slane %v710, %v716
        %v718 = vcombine.low %v693, %v701
        %v719 = vcombine.high %v693, %v701
        %v721 = vunpack.c.l.s4 1934713408
        %v722 = vunpack.c.0.s8 %v721
        %v723 = vlaneseq
        %v724 = vshrl.u32 %v723, 7
        %v725 = vsub.s32 %v722, %v724
        %v726 = vrot.slane %v718, %v725
        %v728 = vunpack.c.l.s4 1934713408
        %v729 = vunpack.c.0.s8 %v728
        %v730 = vlaneseq
        %v731 = vshrl.u32 %v730, 7
        %v732 = vsub.s32 %v729, %v731
        %v733 = vrot.slane %v719, %v732
        %v734 = vcombine.low %v709, %v717
        %v735 = vcombine.high %v709, %v717
        %v737 = vunpack.c.l.s4 1934713408
        %v738 = vunpack.c.0.s8 %v737
        %v739 = vlaneseq
        %v740 = vshrl.u32 %v739, 7
        %v741 = vsub.s32 %v738, %v740
        %v742 = vrot.slane %v734, %v741
        %v744 = vunpack.c.l.s4 1934713408
        %v745 = vunpack.c.0.s8 %v744
        %v746 = vlaneseq
        %v747 = vshrl.u32 %v746, 7
        %v748 = vsub.s32 %v745, %v747
        %v749 = vrot.slane %v735, %v748
        %v750 = vcombine.low %v726, %v742
        %v751 = vcombine.high %v726, %v742
        %v752 = vcombine.low %v733, %v749
        %v753 = vcombine.high %v733, %v749
        %755 = vrot.lane.b32.xlu0 %v452, 120
        %v756 = vpop.permute.xlu0 %755
        %757 = vrot.lane.b32.xlu0 %v452, 112
        %v758 = vpop.permute.xlu0 %757
        %759 = vrot.lane.b32.xlu0 %v452, 104
        %v760 = vpop.permute.xlu0 %759
        %761 = vrot.lane.b32.xlu0 %v452, 64
        %v762 = vpop.permute.xlu0 %761
        %763 = vrot.lane.b32.xlu0 %v756, 64
        %v764 = vpop.permute.xlu0 %763
        %765 = vrot.lane.b32.xlu0 %v758, 64
        %v766 = vpop.permute.xlu0 %765
        %767 = vrot.lane.b32.xlu0 %v760, 64
        %v768 = vpop.permute.xlu0 %767
        %v773 = vcombine.low %v762, %v766
        %v774 = vcombine.high %v762, %v766
        %v776 = vunpack.c.l.s4 1983009808
        %v777 = vunpack.c.0.s8 %v776
        %v778 = vlaneseq
        %v779 = vshrl.u32 %v778, 7
        %v780 = vsub.s32 %v777, %v779
        %v781 = vrot.slane %v773, %v780
        %v783 = vunpack.c.l.s4 1983009808
        %v784 = vunpack.c.0.s8 %v783
        %v785 = vlaneseq
        %v786 = vshrl.u32 %v785, 7
        %v787 = vsub.s32 %v784, %v786
        %v788 = vrot.slane %v774, %v787
        %v789 = vcombine.low %v764, %v768
        %v790 = vcombine.high %v764, %v768
        %v792 = vunpack.c.l.s4 1983009808
        %v793 = vunpack.c.0.s8 %v792
        %v794 = vlaneseq
        %v795 = vshrl.u32 %v794, 7
        %v796 = vsub.s32 %v793, %v795
        %v797 = vrot.slane %v789, %v796
        %v799 = vunpack.c.l.s4 1983009808
        %v800 = vunpack.c.0.s8 %v799
        %v801 = vlaneseq
        %v802 = vshrl.u32 %v801, 7
        %v803 = vsub.s32 %v800, %v802
        %v804 = vrot.slane %v790, %v803
        %v805 = vcombine.low %v781, %v797
        %v806 = vcombine.high %v781, %v797
        %v808 = vunpack.c.l.s4 1934713408
        %v809 = vunpack.c.0.s8 %v808
        %v810 = vlaneseq
        %v811 = vshrl.u32 %v810, 7
        %v812 = vsub.s32 %v809, %v811
        %v813 = vrot.slane %v805, %v812
        %v815 = vunpack.c.l.s4 1934713408
        %v816 = vunpack.c.0.s8 %v815
        %v817 = vlaneseq
        %v818 = vshrl.u32 %v817, 7
        %v819 = vsub.s32 %v816, %v818
        %v820 = vrot.slane %v806, %v819
        %v821 = vcombine.low %v788, %v804
        %v822 = vcombine.high %v788, %v804
        %v824 = vunpack.c.l.s4 1934713408
        %v825 = vunpack.c.0.s8 %v824
        %v826 = vlaneseq
        %v827 = vshrl.u32 %v826, 7
        %v828 = vsub.s32 %v825, %v827
        %v829 = vrot.slane %v821, %v828
        %v831 = vunpack.c.l.s4 1934713408
        %v832 = vunpack.c.0.s8 %v831
        %v833 = vlaneseq
        %v834 = vshrl.u32 %v833, 7
        %v835 = vsub.s32 %v832, %v834
        %v836 = vrot.slane %v822, %v835
        %v837 = vcombine.high %v813, 0.0
        %v838 = vcombine.high %v820, 0.0
        %v839 = vcombine.high %v829, 0.0
        %v840 = vcombine.high %v836, 0.0
        %v841 = vcombine.low %v813, %v820
        %v843 = vunpack.c.l.s4 1983009808
        %v844 = vunpack.c.0.s8 %v843
        %v845 = vlaneseq
        %v846 = vshrl.u32 %v845, 7
        %v847 = vsub.s32 %v844, %v846
        %v848 = vrot.slane %v841, %v847
        %v849 = vcombine.low %v837, %v838
        %v851 = vunpack.c.l.s4 1983009808
        %v852 = vunpack.c.0.s8 %v851
        %v853 = vlaneseq
        %v854 = vshrl.u32 %v853, 7
        %v855 = vsub.s32 %v852, %v854
        %v856 = vrot.slane %v849, %v855
        %v857 = vcombine.low %v829, %v836
        %v859 = vunpack.c.l.s4 1983009808
        %v860 = vunpack.c.0.s8 %v859
        %v861 = vlaneseq
        %v862 = vshrl.u32 %v861, 7
        %v863 = vsub.s32 %v860, %v862
        %v864 = vrot.slane %v857, %v863
        %v865 = vcombine.low %v839, %v840
        %v867 = vunpack.c.l.s4 1983009808
        %v868 = vunpack.c.0.s8 %v867
        %v869 = vlaneseq
        %v870 = vshrl.u32 %v869, 7
        %v871 = vsub.s32 %v868, %v870
        %v872 = vrot.slane %v865, %v871
        %v873 = vcombine.low %v848, %v856
        %v874 = vcombine.high %v848, %v856
        %v876 = vunpack.c.l.s4 1934713408
        %v877 = vunpack.c.0.s8 %v876
        %v878 = vlaneseq
        %v879 = vshrl.u32 %v878, 7
        %v880 = vsub.s32 %v877, %v879
        %v881 = vrot.slane %v873, %v880
        %v883 = vunpack.c.l.s4 1934713408
        %v884 = vunpack.c.0.s8 %v883
        %v885 = vlaneseq
        %v886 = vshrl.u32 %v885, 7
        %v887 = vsub.s32 %v884, %v886
        %v888 = vrot.slane %v874, %v887
        %v889 = vcombine.low %v864, %v872
        %v890 = vcombine.high %v864, %v872
        %v892 = vunpack.c.l.s4 1934713408
        %v893 = vunpack.c.0.s8 %v892
        %v894 = vlaneseq
        %v895 = vshrl.u32 %v894, 7
        %v896 = vsub.s32 %v893, %v895
        %v897 = vrot.slane %v889, %v896
        %v899 = vunpack.c.l.s4 1934713408
        %v900 = vunpack.c.0.s8 %v899
        %v901 = vlaneseq
        %v902 = vshrl.u32 %v901, 7
        %v903 = vsub.s32 %v900, %v902
        %v904 = vrot.slane %v890, %v903
        %v905 = vcombine.low %v881, %v897
        %v906 = vcombine.high %v881, %v897
        %v907 = vcombine.low %v888, %v904
        %v908 = vcombine.high %v888, %v904
        %vm909 = vcmask 64512
        %v911 = vsel %vm909, %v595, 0
        %v914 = vsel %vm909, %v750, 0
        %916 = vmatprep.subr.mxu0 0.0
        %917 = vmatpush1.xpose.msra.mxu0 0.0
        %918 = vmatprep.subr.mxu0 0.0
        %919 = vmatpush1.xpose.msra.mxu0 0.0
        %920 = vmatprep.subr.mxu0 0.0
        %921 = vmatpush1.xpose.msra.mxu0 0.0
        %922 = vmatprep.subr.mxu0 0.0
        %923 = vmatpush1.xpose.msra.mxu0 0.0
        %924 = vmatprep.subr.mxu0 0.0
        %925 = vmatpush1.xpose.msra.mxu0 0.0
        %926 = vmatprep.subr.mxu0 0.0
        %927 = vmatpush1.xpose.msra.mxu0 0.0
        %928 = vmatprep.subr.mxu0 0.0
        %929 = vmatpush1.xpose.msra.mxu0 0.0
        %930 = vmatprep.subr.mxu0 0.0
        %931 = vmatpush1.xpose.msra.mxu0 0.0
        %932 = vmatprep.subr.mxu0 0.0
        %933 = vmatpush1.xpose.msra.mxu0 0.0
        %934 = vmatprep.subr.mxu0 0.0
        %935 = vmatpush1.xpose.msra.mxu0 0.0
        %936 = vmatprep.subr.mxu0 0.0
        %937 = vmatpush1.xpose.msra.mxu0 0.0
        %938 = vmatprep.subr.mxu0 0.0
        %939 = vmatpush1.xpose.msra.mxu0 0.0
        %940 = vmatprep.subr.mxu0 0.0
        %941 = vmatpush1.xpose.msra.mxu0 0.0
        %942 = vmatprep.subr.mxu0 0.0
        %943 = vmatpush1.xpose.msra.mxu0 0.0
        %944 = vmatprep.subr.mxu0 0.0
        %945 = vmatpush1.xpose.msra.mxu0 0.0
        %946 = vmatprep.subr.mxu0 0.0
        %947 = vmatpush1.xpose.msra.mxu0 %v914
        %948 = vmatprep.subr.mxu0 0.0
        %949 = vmatpush2.xpose.msra.mxu0 0.0
        %950 = vmatprep.subr.mxu0 0.0
        %951 = vmatpush2.xpose.msra.mxu0 0.0
        %952 = vmatprep.subr.mxu0 0.0
        %953 = vmatpush2.xpose.msra.mxu0 0.0
        %954 = vmatprep.subr.mxu0 0.0
        %955 = vmatpush2.xpose.msra.mxu0 0.0
        %956 = vmatprep.subr.mxu0 0.0
        %957 = vmatpush2.xpose.msra.mxu0 0.0
        %958 = vmatprep.subr.mxu0 0.0
        %959 = vmatpush2.xpose.msra.mxu0 0.0
        %960 = vmatprep.subr.mxu0 0.0
        %961 = vmatpush2.xpose.msra.mxu0 0.0
        %962 = vmatprep.subr.mxu0 0.0
        %963 = vmatpush2.xpose.msra.mxu0 0.0
        %964 = vmatprep.subr.mxu0 0.0
        %965 = vmatpush2.xpose.msra.mxu0 0.0
        %966 = vmatprep.subr.mxu0 0.0
        %967 = vmatpush2.xpose.msra.mxu0 0.0
        %968 = vmatprep.subr.mxu0 0.0
        %969 = vmatpush2.xpose.msra.mxu0 0.0
        %970 = vmatprep.subr.mxu0 0.0
        %971 = vmatpush2.xpose.msra.mxu0 0.0
        %972 = vmatprep.subr.mxu0 0.0
        %973 = vmatpush2.xpose.msra.mxu0 0.0
        %974 = vmatprep.subr.mxu0 0.0
        %975 = vmatpush2.xpose.msra.mxu0 0.0
        %976 = vmatprep.subr.mxu0 0.0
        %977 = vmatpush2.xpose.msra.mxu0 0.0
        %978 = vmatprep.subr.mxu0 0.0
        %979 = vmatpush2.xpose.msra.mxu0 0.0
        %980 = vmatprep.mubr.f32.mxu0 0.0
        %981 = vmatmul.mubr.f32.gmra.mxu0 %v911
        %v982 = vpop.f32.mrf.mxu0
        %v983 = vadd.f32 0.0, %v982
        %v984 = vpop.f32.mrf.mxu0
        %985 = vdwg.mxu0
        %v987 = vsel %vm909, %v596, 0
        %v990 = vsel %vm909, %v751, 0
        %992 = vmatprep.subr.mxu0 0.0
        %993 = vmatpush1.xpose.msra.mxu0 0.0
        %994 = vmatprep.subr.mxu0 0.0
        %995 = vmatpush1.xpose.msra.mxu0 0.0
        %996 = vmatprep.subr.mxu0 0.0
        %997 = vmatpush1.xpose.msra.mxu0 0.0
        %998 = vmatprep.subr.mxu0 0.0
        %999 = vmatpush1.xpose.msra.mxu0 0.0
        %1000 = vmatprep.subr.mxu0 0.0
        %1001 = vmatpush1.xpose.msra.mxu0 0.0
        %1002 = vmatprep.subr.mxu0 0.0
        %1003 = vmatpush1.xpose.msra.mxu0 0.0
        %1004 = vmatprep.subr.mxu0 0.0
        %1005 = vmatpush1.xpose.msra.mxu0 0.0
        %1006 = vmatprep.subr.mxu0 0.0
        %1007 = vmatpush1.xpose.msra.mxu0 0.0
        %1008 = vmatprep.subr.mxu0 0.0
        %1009 = vmatpush1.xpose.msra.mxu0 0.0
        %1010 = vmatprep.subr.mxu0 0.0
        %1011 = vmatpush1.xpose.msra.mxu0 0.0
        %1012 = vmatprep.subr.mxu0 0.0
        %1013 = vmatpush1.xpose.msra.mxu0 0.0
        %1014 = vmatprep.subr.mxu0 0.0
        %1015 = vmatpush1.xpose.msra.mxu0 0.0
        %1016 = vmatprep.subr.mxu0 0.0
        %1017 = vmatpush1.xpose.msra.mxu0 0.0
        %1018 = vmatprep.subr.mxu0 0.0
        %1019 = vmatpush1.xpose.msra.mxu0 0.0
        %1020 = vmatprep.subr.mxu0 0.0
        %1021 = vmatpush1.xpose.msra.mxu0 0.0
        %1022 = vmatprep.subr.mxu0 0.0
        %1023 = vmatpush1.xpose.msra.mxu0 %v990
        %1024 = vmatprep.subr.mxu0 0.0
        %1025 = vmatpush2.xpose.msra.mxu0 0.0
        %1026 = vmatprep.subr.mxu0 0.0
        %1027 = vmatpush2.xpose.msra.mxu0 0.0
        %1028 = vmatprep.subr.mxu0 0.0
        %1029 = vmatpush2.xpose.msra.mxu0 0.0
        %1030 = vmatprep.subr.mxu0 0.0
        %1031 = vmatpush2.xpose.msra.mxu0 0.0
        %1032 = vmatprep.subr.mxu0 0.0
        %1033 = vmatpush2.xpose.msra.mxu0 0.0
        %1034 = vmatprep.subr.mxu0 0.0
        %1035 = vmatpush2.xpose.msra.mxu0 0.0
        %1036 = vmatprep.subr.mxu0 0.0
        %1037 = vmatpush2.xpose.msra.mxu0 0.0
        %1038 = vmatprep.subr.mxu0 0.0
        %1039 = vmatpush2.xpose.msra.mxu0 0.0
        %1040 = vmatprep.subr.mxu0 0.0
        %1041 = vmatpush2.xpose.msra.mxu0 0.0
        %1042 = vmatprep.subr.mxu0 0.0
        %1043 = vmatpush2.xpose.msra.mxu0 0.0
        %1044 = vmatprep.subr.mxu0 0.0
        %1045 = vmatpush2.xpose.msra.mxu0 0.0
        %1046 = vmatprep.subr.mxu0 0.0
        %1047 = vmatpush2.xpose.msra.mxu0 0.0
        %1048 = vmatprep.subr.mxu0 0.0
        %1049 = vmatpush2.xpose.msra.mxu0 0.0
        %1050 = vmatprep.subr.mxu0 0.0
        %1051 = vmatpush2.xpose.msra.mxu0 0.0
        %1052 = vmatprep.subr.mxu0 0.0
        %1053 = vmatpush2.xpose.msra.mxu0 0.0
        %1054 = vmatprep.subr.mxu0 0.0
        %1055 = vmatpush2.xpose.msra.mxu0 0.0
        %1056 = vmatprep.mubr.f32.mxu0 0.0
        %1057 = vmatmul.mubr.f32.gmra.mxu0 %v987
        %v1058 = vpop.f32.mrf.mxu0
        %v1059 = vadd.f32 0.0, %v1058
        %v1060 = vpop.f32.mrf.mxu0
        %1061 = vdwg.mxu0
        %v1063 = vsel %vm909, %v597, 0
        %v1066 = vsel %vm909, %v752, 0
        %1068 = vmatprep.subr.mxu0 0.0
        %1069 = vmatpush1.xpose.msra.mxu0 0.0
        %1070 = vmatprep.subr.mxu0 0.0
        %1071 = vmatpush1.xpose.msra.mxu0 0.0
        %1072 = vmatprep.subr.mxu0 0.0
        %1073 = vmatpush1.xpose.msra.mxu0 0.0
        %1074 = vmatprep.subr.mxu0 0.0
        %1075 = vmatpush1.xpose.msra.mxu0 0.0
        %1076 = vmatprep.subr.mxu0 0.0
        %1077 = vmatpush1.xpose.msra.mxu0 0.0
        %1078 = vmatprep.subr.mxu0 0.0
        %1079 = vmatpush1.xpose.msra.mxu0 0.0
        %1080 = vmatprep.subr.mxu0 0.0
        %1081 = vmatpush1.xpose.msra.mxu0 0.0
        %1082 = vmatprep.subr.mxu0 0.0
        %1083 = vmatpush1.xpose.msra.mxu0 0.0
        %1084 = vmatprep.subr.mxu0 0.0
        %1085 = vmatpush1.xpose.msra.mxu0 0.0
        %1086 = vmatprep.subr.mxu0 0.0
        %1087 = vmatpush1.xpose.msra.mxu0 0.0
        %1088 = vmatprep.subr.mxu0 0.0
        %1089 = vmatpush1.xpose.msra.mxu0 0.0
        %1090 = vmatprep.subr.mxu0 0.0
        %1091 = vmatpush1.xpose.msra.mxu0 0.0
        %1092 = vmatprep.subr.mxu0 0.0
        %1093 = vmatpush1.xpose.msra.mxu0 0.0
        %1094 = vmatprep.subr.mxu0 0.0
        %1095 = vmatpush1.xpose.msra.mxu0 0.0
        %1096 = vmatprep.subr.mxu0 0.0
        %1097 = vmatpush1.xpose.msra.mxu0 0.0
        %1098 = vmatprep.subr.mxu0 0.0
        %1099 = vmatpush1.xpose.msra.mxu0 %v1066
        %1100 = vmatprep.subr.mxu0 0.0
        %1101 = vmatpush2.xpose.msra.mxu0 0.0
        %1102 = vmatprep.subr.mxu0 0.0
        %1103 = vmatpush2.xpose.msra.mxu0 0.0
        %1104 = vmatprep.subr.mxu0 0.0
        %1105 = vmatpush2.xpose.msra.mxu0 0.0
        %1106 = vmatprep.subr.mxu0 0.0
        %1107 = vmatpush2.xpose.msra.mxu0 0.0
        %1108 = vmatprep.subr.mxu0 0.0
        %1109 = vmatpush2.xpose.msra.mxu0 0.0
        %1110 = vmatprep.subr.mxu0 0.0
        %1111 = vmatpush2.xpose.msra.mxu0 0.0
        %1112 = vmatprep.subr.mxu0 0.0
        %1113 = vmatpush2.xpose.msra.mxu0 0.0
        %1114 = vmatprep.subr.mxu0 0.0
        %1115 = vmatpush2.xpose.msra.mxu0 0.0
        %1116 = vmatprep.subr.mxu0 0.0
        %1117 = vmatpush2.xpose.msra.mxu0 0.0
        %1118 = vmatprep.subr.mxu0 0.0
        %1119 = vmatpush2.xpose.msra.mxu0 0.0
        %1120 = vmatprep.subr.mxu0 0.0
        %1121 = vmatpush2.xpose.msra.mxu0 0.0
        %1122 = vmatprep.subr.mxu0 0.0
        %1123 = vmatpush2.xpose.msra.mxu0 0.0
        %1124 = vmatprep.subr.mxu0 0.0
        %1125 = vmatpush2.xpose.msra.mxu0 0.0
        %1126 = vmatprep.subr.mxu0 0.0
        %1127 = vmatpush2.xpose.msra.mxu0 0.0
        %1128 = vmatprep.subr.mxu0 0.0
        %1129 = vmatpush2.xpose.msra.mxu0 0.0
        %1130 = vmatprep.subr.mxu0 0.0
        %1131 = vmatpush2.xpose.msra.mxu0 0.0
        %1132 = vmatprep.mubr.f32.mxu0 0.0
        %1133 = vmatmul.mubr.f32.gmra.mxu0 %v1063
        %v1134 = vpop.f32.mrf.mxu0
        %v1135 = vadd.f32 0.0, %v1134
        %v1136 = vpop.f32.mrf.mxu0
        %1137 = vdwg.mxu0
        %v1139 = vsel %vm909, %v598, 0
        %v1142 = vsel %vm909, %v753, 0
        %1144 = vmatprep.subr.mxu0 0.0
        %1145 = vmatpush1.xpose.msra.mxu0 0.0
        %1146 = vmatprep.subr.mxu0 0.0
        %1147 = vmatpush1.xpose.msra.mxu0 0.0
        %1148 = vmatprep.subr.mxu0 0.0
        %1149 = vmatpush1.xpose.msra.mxu0 0.0
        %1150 = vmatprep.subr.mxu0 0.0
        %1151 = vmatpush1.xpose.msra.mxu0 0.0
        %1152 = vmatprep.subr.mxu0 0.0
        %1153 = vmatpush1.xpose.msra.mxu0 0.0
        %1154 = vmatprep.subr.mxu0 0.0
        %1155 = vmatpush1.xpose.msra.mxu0 0.0
        %1156 = vmatprep.subr.mxu0 0.0
        %1157 = vmatpush1.xpose.msra.mxu0 0.0
        %1158 = vmatprep.subr.mxu0 0.0
        %1159 = vmatpush1.xpose.msra.mxu0 0.0
        %1160 = vmatprep.subr.mxu0 0.0
        %1161 = vmatpush1.xpose.msra.mxu0 0.0
        %1162 = vmatprep.subr.mxu0 0.0
        %1163 = vmatpush1.xpose.msra.mxu0 0.0
        %1164 = vmatprep.subr.mxu0 0.0
        %1165 = vmatpush1.xpose.msra.mxu0 0.0
        %1166 = vmatprep.subr.mxu0 0.0
        %1167 = vmatpush1.xpose.msra.mxu0 0.0
        %1168 = vmatprep.subr.mxu0 0.0
        %1169 = vmatpush1.xpose.msra.mxu0 0.0
        %1170 = vmatprep.subr.mxu0 0.0
        %1171 = vmatpush1.xpose.msra.mxu0 0.0
        %1172 = vmatprep.subr.mxu0 0.0
        %1173 = vmatpush1.xpose.msra.mxu0 0.0
        %1174 = vmatprep.subr.mxu0 0.0
        %1175 = vmatpush1.xpose.msra.mxu0 %v1142
        %1176 = vmatprep.subr.mxu0 0.0
        %1177 = vmatpush2.xpose.msra.mxu0 0.0
        %1178 = vmatprep.subr.mxu0 0.0
        %1179 = vmatpush2.xpose.msra.mxu0 0.0
        %1180 = vmatprep.subr.mxu0 0.0
        %1181 = vmatpush2.xpose.msra.mxu0 0.0
        %1182 = vmatprep.subr.mxu0 0.0
        %1183 = vmatpush2.xpose.msra.mxu0 0.0
        %1184 = vmatprep.subr.mxu0 0.0
        %1185 = vmatpush2.xpose.msra.mxu0 0.0
        %1186 = vmatprep.subr.mxu0 0.0
        %1187 = vmatpush2.xpose.msra.mxu0 0.0
        %1188 = vmatprep.subr.mxu0 0.0
        %1189 = vmatpush2.xpose.msra.mxu0 0.0
        %1190 = vmatprep.subr.mxu0 0.0
        %1191 = vmatpush2.xpose.msra.mxu0 0.0
        %1192 = vmatprep.subr.mxu0 0.0
        %1193 = vmatpush2.xpose.msra.mxu0 0.0
        %1194 = vmatprep.subr.mxu0 0.0
        %1195 = vmatpush2.xpose.msra.mxu0 0.0
        %1196 = vmatprep.subr.mxu0 0.0
        %1197 = vmatpush2.xpose.msra.mxu0 0.0
        %1198 = vmatprep.subr.mxu0 0.0
        %1199 = vmatpush2.xpose.msra.mxu0 0.0
        %1200 = vmatprep.subr.mxu0 0.0
        %1201 = vmatpush2.xpose.msra.mxu0 0.0
        %1202 = vmatprep.subr.mxu0 0.0
        %1203 = vmatpush2.xpose.msra.mxu0 0.0
        %1204 = vmatprep.subr.mxu0 0.0
        %1205 = vmatpush2.xpose.msra.mxu0 0.0
        %1206 = vmatprep.subr.mxu0 0.0
        %1207 = vmatpush2.xpose.msra.mxu0 0.0
        %1208 = vmatprep.mubr.f32.mxu0 0.0
        %1209 = vmatmul.mubr.f32.gmra.mxu0 %v1139
        %v1210 = vpop.f32.mrf.mxu0
        %v1211 = vadd.f32 0.0, %v1210
        %v1212 = vpop.f32.mrf.mxu0
        %1213 = vdwg.mxu0
        %v1214 = vsel %vm909, %v983, -inf
        %1215 = vmax.xlane.f32.xlu0 %v1214
        %v1216 = vpop.xlane.xlu0 %1215
        %v1217 = vsel %vm909, %v1059, -inf
        %1218 = vmax.xlane.f32.xlu0 %v1217
        %v1219 = vpop.xlane.xlu0 %1218
        %v1220 = vsel %vm909, %v1135, -inf
        %1221 = vmax.xlane.f32.xlu0 %v1220
        %v1222 = vpop.xlane.xlu0 %1221
        %v1223 = vsel %vm909, %v1211, -inf
        %1224 = vmax.xlane.f32.xlu0 %v1223
        %v1225 = vpop.xlane.xlu0 %1224
        %v1226 = vsub.f32 %v983, %v1216
        %v1227 = vsub.f32 %v1059, %v1219
        %v1228 = vsub.f32 %v1135, %v1222
        %v1229 = vsub.f32 %v1211, %v1225
        %v1230 = vmul.f32 %v1226, 1.442695
        %v1231 = vpow.pop %v1230
        %v1232 = vmul.f32 %v1227, 1.442695
        %v1233 = vpow.pop %v1232
        %v1234 = vmul.f32 %v1228, 1.442695
        %v1235 = vpow.pop %v1234
        %v1236 = vmul.f32 %v1229, 1.442695
        %v1237 = vpow.pop %v1236
        %v1238 = vsel %vm909, %v1231, 0.0
        %1239 = vadd.xlane.f32.xlu0 %v1238
        %v1240 = vpop.xlane.xlu0 %1239
        %v1241 = vsel %vm909, %v1233, 0.0
        %1242 = vadd.xlane.f32.xlu0 %v1241
        %v1243 = vpop.xlane.xlu0 %1242
        %v1244 = vsel %vm909, %v1235, 0.0
        %1245 = vadd.xlane.f32.xlu0 %v1244
        %v1246 = vpop.xlane.xlu0 %1245
        %v1247 = vsel %vm909, %v1237, 0.0
        %1248 = vadd.xlane.f32.xlu0 %v1247
        %v1249 = vpop.xlane.xlu0 %1248
        %v1250 = vrcp.pop %v1240
        %v1251 = vmul.f32 %v1231, %v1250
        %v1252 = vrcp.pop %v1243
        %v1253 = vmul.f32 %v1233, %v1252
        %v1254 = vrcp.pop %v1246
        %v1255 = vmul.f32 %v1235, %v1254
        %v1256 = vrcp.pop %v1249
        %v1257 = vmul.f32 %v1237, %v1256
        %v1259 = vsel %vm909, %v1251, 0
        %1261 = vmatprep.subr.mxu0 0.0
        %1262 = vmatpush1.msra.mxu0 0.0
        %1263 = vmatprep.subr.mxu0 0.0
        %1264 = vmatpush1.msra.mxu0 0.0
        %1265 = vmatprep.subr.mxu0 0.0
        %1266 = vmatpush1.msra.mxu0 0.0
        %1267 = vmatprep.subr.mxu0 0.0
        %1268 = vmatpush1.msra.mxu0 0.0
        %1269 = vmatprep.subr.mxu0 0.0
        %1270 = vmatpush1.msra.mxu0 0.0
        %1271 = vmatprep.subr.mxu0 0.0
        %1272 = vmatpush1.msra.mxu0 0.0
        %1273 = vmatprep.subr.mxu0 0.0
        %1274 = vmatpush1.msra.mxu0 0.0
        %1275 = vmatprep.subr.mxu0 0.0
        %1276 = vmatpush1.msra.mxu0 0.0
        %1277 = vmatprep.subr.mxu0 0.0
        %1278 = vmatpush1.msra.mxu0 0.0
        %1279 = vmatprep.subr.mxu0 0.0
        %1280 = vmatpush1.msra.mxu0 0.0
        %1281 = vmatprep.subr.mxu0 0.0
        %1282 = vmatpush1.msra.mxu0 0.0
        %1283 = vmatprep.subr.mxu0 0.0
        %1284 = vmatpush1.msra.mxu0 0.0
        %1285 = vmatprep.subr.mxu0 0.0
        %1286 = vmatpush1.msra.mxu0 0.0
        %1287 = vmatprep.subr.mxu0 0.0
        %1288 = vmatpush1.msra.mxu0 0.0
        %1289 = vmatprep.subr.mxu0 0.0
        %1290 = vmatpush1.msra.mxu0 0.0
        %1291 = vmatprep.subr.mxu0 0.0
        %1292 = vmatpush1.msra.mxu0 %v905
        %1293 = vmatprep.subr.mxu0 0.0
        %1294 = vmatpush2.msra.mxu0 0.0
        %1295 = vmatprep.subr.mxu0 0.0
        %1296 = vmatpush2.msra.mxu0 0.0
        %1297 = vmatprep.subr.mxu0 0.0
        %1298 = vmatpush2.msra.mxu0 0.0
        %1299 = vmatprep.subr.mxu0 0.0
        %1300 = vmatpush2.msra.mxu0 0.0
        %1301 = vmatprep.subr.mxu0 0.0
        %1302 = vmatpush2.msra.mxu0 0.0
        %1303 = vmatprep.subr.mxu0 0.0
        %1304 = vmatpush2.msra.mxu0 0.0
        %1305 = vmatprep.subr.mxu0 0.0
        %1306 = vmatpush2.msra.mxu0 0.0
        %1307 = vmatprep.subr.mxu0 0.0
        %1308 = vmatpush2.msra.mxu0 0.0
        %1309 = vmatprep.subr.mxu0 0.0
        %1310 = vmatpush2.msra.mxu0 0.0
        %1311 = vmatprep.subr.mxu0 0.0
        %1312 = vmatpush2.msra.mxu0 0.0
        %1313 = vmatprep.subr.mxu0 0.0
        %1314 = vmatpush2.msra.mxu0 0.0
        %1315 = vmatprep.subr.mxu0 0.0
        %1316 = vmatpush2.msra.mxu0 0.0
        %1317 = vmatprep.subr.mxu0 0.0
        %1318 = vmatpush2.msra.mxu0 0.0
        %1319 = vmatprep.subr.mxu0 0.0
        %1320 = vmatpush2.msra.mxu0 0.0
        %1321 = vmatprep.subr.mxu0 0.0
        %1322 = vmatpush2.msra.mxu0 0.0
        %1323 = vmatprep.subr.mxu0 0.0
        %1324 = vmatpush2.msra.mxu0 0.0
        %1325 = vmatprep.mubr.f32.mxu0 0.0
        %1326 = vmatmul.mubr.f32.gmra.mxu0 %v1259
        %v1327 = vpop.f32.mrf.mxu0
        %v1328 = vadd.f32 0.0, %v1327
        %v1329 = vpop.f32.mrf.mxu0
        %1330 = vdwg.mxu0
        %v1332 = vsel %vm909, %v1253, 0
        %1334 = vmatprep.subr.mxu0 0.0
        %1335 = vmatpush1.msra.mxu0 0.0
        %1336 = vmatprep.subr.mxu0 0.0
        %1337 = vmatpush1.msra.mxu0 0.0
        %1338 = vmatprep.subr.mxu0 0.0
        %1339 = vmatpush1.msra.mxu0 0.0
        %1340 = vmatprep.subr.mxu0 0.0
        %1341 = vmatpush1.msra.mxu0 0.0
        %1342 = vmatprep.subr.mxu0 0.0
        %1343 = vmatpush1.msra.mxu0 0.0
        %1344 = vmatprep.subr.mxu0 0.0
        %1345 = vmatpush1.msra.mxu0 0.0
        %1346 = vmatprep.subr.mxu0 0.0
        %1347 = vmatpush1.msra.mxu0 0.0
        %1348 = vmatprep.subr.mxu0 0.0
        %1349 = vmatpush1.msra.mxu0 0.0
        %1350 = vmatprep.subr.mxu0 0.0
        %1351 = vmatpush1.msra.mxu0 0.0
        %1352 = vmatprep.subr.mxu0 0.0
        %1353 = vmatpush1.msra.mxu0 0.0
        %1354 = vmatprep.subr.mxu0 0.0
        %1355 = vmatpush1.msra.mxu0 0.0
        %1356 = vmatprep.subr.mxu0 0.0
        %1357 = vmatpush1.msra.mxu0 0.0
        %1358 = vmatprep.subr.mxu0 0.0
        %1359 = vmatpush1.msra.mxu0 0.0
        %1360 = vmatprep.subr.mxu0 0.0
        %1361 = vmatpush1.msra.mxu0 0.0
        %1362 = vmatprep.subr.mxu0 0.0
        %1363 = vmatpush1.msra.mxu0 0.0
        %1364 = vmatprep.subr.mxu0 0.0
        %1365 = vmatpush1.msra.mxu0 %v906
        %1366 = vmatprep.subr.mxu0 0.0
        %1367 = vmatpush2.msra.mxu0 0.0
        %1368 = vmatprep.subr.mxu0 0.0
        %1369 = vmatpush2.msra.mxu0 0.0
        %1370 = vmatprep.subr.mxu0 0.0
        %1371 = vmatpush2.msra.mxu0 0.0
        %1372 = vmatprep.subr.mxu0 0.0
        %1373 = vmatpush2.msra.mxu0 0.0
        %1374 = vmatprep.subr.mxu0 0.0
        %1375 = vmatpush2.msra.mxu0 0.0
        %1376 = vmatprep.subr.mxu0 0.0
        %1377 = vmatpush2.msra.mxu0 0.0
        %1378 = vmatprep.subr.mxu0 0.0
        %1379 = vmatpush2.msra.mxu0 0.0
        %1380 = vmatprep.subr.mxu0 0.0
        %1381 = vmatpush2.msra.mxu0 0.0
        %1382 = vmatprep.subr.mxu0 0.0
        %1383 = vmatpush2.msra.mxu0 0.0
        %1384 = vmatprep.subr.mxu0 0.0
        %1385 = vmatpush2.msra.mxu0 0.0
        %1386 = vmatprep.subr.mxu0 0.0
        %1387 = vmatpush2.msra.mxu0 0.0
        %1388 = vmatprep.subr.mxu0 0.0
        %1389 = vmatpush2.msra.mxu0 0.0
        %1390 = vmatprep.subr.mxu0 0.0
        %1391 = vmatpush2.msra.mxu0 0.0
        %1392 = vmatprep.subr.mxu0 0.0
        %1393 = vmatpush2.msra.mxu0 0.0
        %1394 = vmatprep.subr.mxu0 0.0
        %1395 = vmatpush2.msra.mxu0 0.0
        %1396 = vmatprep.subr.mxu0 0.0
        %1397 = vmatpush2.msra.mxu0 0.0
        %1398 = vmatprep.mubr.f32.mxu0 0.0
        %1399 = vmatmul.mubr.f32.gmra.mxu0 %v1332
        %v1400 = vpop.f32.mrf.mxu0
        %v1401 = vadd.f32 0.0, %v1400
        %v1402 = vpop.f32.mrf.mxu0
        %1403 = vdwg.mxu0
        %v1405 = vsel %vm909, %v1255, 0
        %1407 = vmatprep.subr.mxu0 0.0
        %1408 = vmatpush1.msra.mxu0 0.0
        %1409 = vmatprep.subr.mxu0 0.0
        %1410 = vmatpush1.msra.mxu0 0.0
        %1411 = vmatprep.subr.mxu0 0.0
        %1412 = vmatpush1.msra.mxu0 0.0
        %1413 = vmatprep.subr.mxu0 0.0
        %1414 = vmatpush1.msra.mxu0 0.0
        %1415 = vmatprep.subr.mxu0 0.0
        %1416 = vmatpush1.msra.mxu0 0.0
        %1417 = vmatprep.subr.mxu0 0.0
        %1418 = vmatpush1.msra.mxu0 0.0
        %1419 = vmatprep.subr.mxu0 0.0
        %1420 = vmatpush1.msra.mxu0 0.0
        %1421 = vmatprep.subr.mxu0 0.0
        %1422 = vmatpush1.msra.mxu0 0.0
        %1423 = vmatprep.subr.mxu0 0.0
        %1424 = vmatpush1.msra.mxu0 0.0
        %1425 = vmatprep.subr.mxu0 0.0
        %1426 = vmatpush1.msra.mxu0 0.0
        %1427 = vmatprep.subr.mxu0 0.0
        %1428 = vmatpush1.msra.mxu0 0.0
        %1429 = vmatprep.subr.mxu0 0.0
        %1430 = vmatpush1.msra.mxu0 0.0
        %1431 = vmatprep.subr.mxu0 0.0
        %1432 = vmatpush1.msra.mxu0 0.0
        %1433 = vmatprep.subr.mxu0 0.0
        %1434 = vmatpush1.msra.mxu0 0.0
        %1435 = vmatprep.subr.mxu0 0.0
        %1436 = vmatpush1.msra.mxu0 0.0
        %1437 = vmatprep.subr.mxu0 0.0
        %1438 = vmatpush1.msra.mxu0 %v907
        %1439 = vmatprep.subr.mxu0 0.0
        %1440 = vmatpush2.msra.mxu0 0.0
        %1441 = vmatprep.subr.mxu0 0.0
        %1442 = vmatpush2.msra.mxu0 0.0
        %1443 = vmatprep.subr.mxu0 0.0
        %1444 = vmatpush2.msra.mxu0 0.0
        %1445 = vmatprep.subr.mxu0 0.0
        %1446 = vmatpush2.msra.mxu0 0.0
        %1447 = vmatprep.subr.mxu0 0.0
        %1448 = vmatpush2.msra.mxu0 0.0
        %1449 = vmatprep.subr.mxu0 0.0
        %1450 = vmatpush2.msra.mxu0 0.0
        %1451 = vmatprep.subr.mxu0 0.0
        %1452 = vmatpush2.msra.mxu0 0.0
        %1453 = vmatprep.subr.mxu0 0.0
        %1454 = vmatpush2.msra.mxu0 0.0
        %1455 = vmatprep.subr.mxu0 0.0
        %1456 = vmatpush2.msra.mxu0 0.0
        %1457 = vmatprep.subr.mxu0 0.0
        %1458 = vmatpush2.msra.mxu0 0.0
        %1459 = vmatprep.subr.mxu0 0.0
        %1460 = vmatpush2.msra.mxu0 0.0
        %1461 = vmatprep.subr.mxu0 0.0
        %1462 = vmatpush2.msra.mxu0 0.0
        %1463 = vmatprep.subr.mxu0 0.0
        %1464 = vmatpush2.msra.mxu0 0.0
        %1465 = vmatprep.subr.mxu0 0.0
        %1466 = vmatpush2.msra.mxu0 0.0
        %1467 = vmatprep.subr.mxu0 0.0
        %1468 = vmatpush2.msra.mxu0 0.0
        %1469 = vmatprep.subr.mxu0 0.0
        %1470 = vmatpush2.msra.mxu0 0.0
        %1471 = vmatprep.mubr.f32.mxu0 0.0
        %1472 = vmatmul.mubr.f32.gmra.mxu0 %v1405
        %v1473 = vpop.f32.mrf.mxu0
        %v1474 = vadd.f32 0.0, %v1473
        %v1475 = vpop.f32.mrf.mxu0
        %1476 = vdwg.mxu0
        %v1478 = vsel %vm909, %v1257, 0
        %1480 = vmatprep.subr.mxu0 0.0
        %1481 = vmatpush1.msra.mxu0 0.0
        %1482 = vmatprep.subr.mxu0 0.0
        %1483 = vmatpush1.msra.mxu0 0.0
        %1484 = vmatprep.subr.mxu0 0.0
        %1485 = vmatpush1.msra.mxu0 0.0
        %1486 = vmatprep.subr.mxu0 0.0
        %1487 = vmatpush1.msra.mxu0 0.0
        %1488 = vmatprep.subr.mxu0 0.0
        %1489 = vmatpush1.msra.mxu0 0.0
        %1490 = vmatprep.subr.mxu0 0.0
        %1491 = vmatpush1.msra.mxu0 0.0
        %1492 = vmatprep.subr.mxu0 0.0
        %1493 = vmatpush1.msra.mxu0 0.0
        %1494 = vmatprep.subr.mxu0 0.0
        %1495 = vmatpush1.msra.mxu0 0.0
        %1496 = vmatprep.subr.mxu0 0.0
        %1497 = vmatpush1.msra.mxu0 0.0
        %1498 = vmatprep.subr.mxu0 0.0
        %1499 = vmatpush1.msra.mxu0 0.0
        %1500 = vmatprep.subr.mxu0 0.0
        %1501 = vmatpush1.msra.mxu0 0.0
        %1502 = vmatprep.subr.mxu0 0.0
        %1503 = vmatpush1.msra.mxu0 0.0
        %1504 = vmatprep.subr.mxu0 0.0
        %1505 = vmatpush1.msra.mxu0 0.0
        %1506 = vmatprep.subr.mxu0 0.0
        %1507 = vmatpush1.msra.mxu0 0.0
        %1508 = vmatprep.subr.mxu0 0.0
        %1509 = vmatpush1.msra.mxu0 0.0
        %1510 = vmatprep.subr.mxu0 0.0
        %1511 = vmatpush1.msra.mxu0 %v908
        %1512 = vmatprep.subr.mxu0 0.0
        %1513 = vmatpush2.msra.mxu0 0.0
        %1514 = vmatprep.subr.mxu0 0.0
        %1515 = vmatpush2.msra.mxu0 0.0
        %1516 = vmatprep.subr.mxu0 0.0
        %1517 = vmatpush2.msra.mxu0 0.0
        %1518 = vmatprep.subr.mxu0 0.0
        %1519 = vmatpush2.msra.mxu0 0.0
        %1520 = vmatprep.subr.mxu0 0.0
        %1521 = vmatpush2.msra.mxu0 0.0
        %1522 = vmatprep.subr.mxu0 0.0
        %1523 = vmatpush2.msra.mxu0 0.0
        %1524 = vmatprep.subr.mxu0 0.0
        %1525 = vmatpush2.msra.mxu0 0.0
        %1526 = vmatprep.subr.mxu0 0.0
        %1527 = vmatpush2.msra.mxu0 0.0
        %1528 = vmatprep.subr.mxu0 0.0
        %1529 = vmatpush2.msra.mxu0 0.0
        %1530 = vmatprep.subr.mxu0 0.0
        %1531 = vmatpush2.msra.mxu0 0.0
        %1532 = vmatprep.subr.mxu0 0.0
        %1533 = vmatpush2.msra.mxu0 0.0
        %1534 = vmatprep.subr.mxu0 0.0
        %1535 = vmatpush2.msra.mxu0 0.0
        %1536 = vmatprep.subr.mxu0 0.0
        %1537 = vmatpush2.msra.mxu0 0.0
        %1538 = vmatprep.subr.mxu0 0.0
        %1539 = vmatpush2.msra.mxu0 0.0
        %1540 = vmatprep.subr.mxu0 0.0
        %1541 = vmatpush2.msra.mxu0 0.0
        %1542 = vmatprep.subr.mxu0 0.0
        %1543 = vmatpush2.msra.mxu0 0.0
        %1544 = vmatprep.mubr.f32.mxu0 0.0
        %1545 = vmatmul.mubr.f32.gmra.mxu0 %v1478
        %v1546 = vpop.f32.mrf.mxu0
        %v1547 = vadd.f32 0.0, %v1546
        %v1548 = vpop.f32.mrf.mxu0
        %1549 = vdwg.mxu0
        %v1550 = vcombine.low %v1328, %v1474
        %v1551 = vcombine.high %v1328, %v1474
        %v1553 = vunpack.c.l.s4 1983009808
        %v1554 = vunpack.c.0.s8 %v1553
        %v1555 = vlaneseq
        %v1556 = vshrl.u32 %v1555, 7
        %v1557 = vsub.s32 %v1554, %v1556
        %v1558 = vrot.slane %v1550, %v1557
        %v1560 = vunpack.c.l.s4 1983009808
        %v1561 = vunpack.c.0.s8 %v1560
        %v1562 = vlaneseq
        %v1563 = vshrl.u32 %v1562, 7
        %v1564 = vsub.s32 %v1561, %v1563
        %v1565 = vrot.slane %v1551, %v1564
        %v1566 = vcombine.low %v1401, %v1547
        %v1567 = vcombine.high %v1401, %v1547
        %v1569 = vunpack.c.l.s4 1983009808
        %v1570 = vunpack.c.0.s8 %v1569
        %v1571 = vlaneseq
        %v1572 = vshrl.u32 %v1571, 7
        %v1573 = vsub.s32 %v1570, %v1572
        %v1574 = vrot.slane %v1566, %v1573
        %v1576 = vunpack.c.l.s4 1983009808
        %v1577 = vunpack.c.0.s8 %v1576
        %v1578 = vlaneseq
        %v1579 = vshrl.u32 %v1578, 7
        %v1580 = vsub.s32 %v1577, %v1579
        %v1581 = vrot.slane %v1567, %v1580
        %v1582 = vcombine.low %v1558, %v1574
        %v1583 = vcombine.high %v1558, %v1574
        %v1585 = vunpack.c.l.s4 1934713408
        %v1586 = vunpack.c.0.s8 %v1585
        %v1587 = vlaneseq
        %v1588 = vshrl.u32 %v1587, 7
        %v1589 = vsub.s32 %v1586, %v1588
        %v1590 = vrot.slane %v1582, %v1589
        %v1592 = vunpack.c.l.s4 1934713408
        %v1593 = vunpack.c.0.s8 %v1592
        %v1594 = vlaneseq
        %v1595 = vshrl.u32 %v1594, 7
        %v1596 = vsub.s32 %v1593, %v1595
        %v1597 = vrot.slane %v1583, %v1596
        %v1598 = vcombine.low %v1565, %v1581
        %v1599 = vcombine.high %v1565, %v1581
        %v1601 = vunpack.c.l.s4 1934713408
        %v1602 = vunpack.c.0.s8 %v1601
        %v1603 = vlaneseq
        %v1604 = vshrl.u32 %v1603, 7
        %v1605 = vsub.s32 %v1602, %v1604
        %v1606 = vrot.slane %v1598, %v1605
        %v1608 = vunpack.c.l.s4 1934713408
        %v1609 = vunpack.c.0.s8 %v1608
        %v1610 = vlaneseq
        %v1611 = vshrl.u32 %v1610, 7
        %v1612 = vsub.s32 %v1609, %v1611
        %v1613 = vrot.slane %v1599, %v1612
        %v1614 = vcombine.high %v1590, 0.0
        %v1615 = vcombine.high %v1597, 0.0
        %v1616 = vcombine.high %v1606, 0.0
        %v1617 = vcombine.high %v1613, 0.0
        %v1618 = vcombine.low %v1590, %v1597
        %v1620 = vunpack.c.l.s4 1983009808
        %v1621 = vunpack.c.0.s8 %v1620
        %v1622 = vlaneseq
        %v1623 = vshrl.u32 %v1622, 7
        %v1624 = vsub.s32 %v1621, %v1623
        %v1625 = vrot.slane %v1618, %v1624
        %v1626 = vcombine.low %v1614, %v1615
        %v1628 = vunpack.c.l.s4 1983009808
        %v1629 = vunpack.c.0.s8 %v1628
        %v1630 = vlaneseq
        %v1631 = vshrl.u32 %v1630, 7
        %v1632 = vsub.s32 %v1629, %v1631
        %v1633 = vrot.slane %v1626, %v1632
        %v1634 = vcombine.low %v1606, %v1613
        %v1636 = vunpack.c.l.s4 1983009808
        %v1637 = vunpack.c.0.s8 %v1636
        %v1638 = vlaneseq
        %v1639 = vshrl.u32 %v1638, 7
        %v1640 = vsub.s32 %v1637, %v1639
        %v1641 = vrot.slane %v1634, %v1640
        %v1642 = vcombine.low %v1616, %v1617
        %v1644 = vunpack.c.l.s4 1983009808
        %v1645 = vunpack.c.0.s8 %v1644
        %v1646 = vlaneseq
        %v1647 = vshrl.u32 %v1646, 7
        %v1648 = vsub.s32 %v1645, %v1647
        %v1649 = vrot.slane %v1642, %v1648
        %v1650 = vcombine.low %v1625, %v1633
        %v1651 = vcombine.high %v1625, %v1633
        %v1653 = vunpack.c.l.s4 1934713408
        %v1654 = vunpack.c.0.s8 %v1653
        %v1655 = vlaneseq
        %v1656 = vshrl.u32 %v1655, 7
        %v1657 = vsub.s32 %v1654, %v1656
        %v1658 = vrot.slane %v1650, %v1657
        %v1660 = vunpack.c.l.s4 1934713408
        %v1661 = vunpack.c.0.s8 %v1660
        %v1662 = vlaneseq
        %v1663 = vshrl.u32 %v1662, 7
        %v1664 = vsub.s32 %v1661, %v1663
        %v1665 = vrot.slane %v1651, %v1664
        %v1666 = vcombine.low %v1641, %v1649
        %v1667 = vcombine.high %v1641, %v1649
        %v1669 = vunpack.c.l.s4 1934713408
        %v1670 = vunpack.c.0.s8 %v1669
        %v1671 = vlaneseq
        %v1672 = vshrl.u32 %v1671, 7
        %v1673 = vsub.s32 %v1670, %v1672
        %v1674 = vrot.slane %v1666, %v1673
        %v1676 = vunpack.c.l.s4 1934713408
        %v1677 = vunpack.c.0.s8 %v1676
        %v1678 = vlaneseq
        %v1679 = vshrl.u32 %v1678, 7
        %v1680 = vsub.s32 %v1677, %v1679
        %v1681 = vrot.slane %v1667, %v1680
        %v1682 = vcombine.low %v1658, %v1674
        %v1683 = vcombine.high %v1658, %v1674
        %v1684 = vcombine.low %v1665, %v1681
        %v1685 = vcombine.high %v1665, %v1681
        %1687 = vrot.lane.b32.xlu0 %v1683, 8
        %v1688 = vpop.permute.xlu0 %1687
        %1691 = vrot.lane.b32.xlu0 %v1684, 16
        %v1692 = vpop.permute.xlu0 %1691
        %1695 = vrot.lane.b32.xlu0 %v1685, 24
        %v1696 = vpop.permute.xlu0 %1695
        %v1698 = vsel %vm909, %v1682, %v1688
        %vm1699 = vcmask 130048
        %v1700 = vsel %vm1699, %v1698, %v1692
        %vm1701 = vcmask 195584
        %v1702 = vsel %vm1701, %v1700, %v1696
        %v1703 = vld [vmem:[%s2] sm:$0xff]
        %v1704 = vld [vmem:[%s2 + $0x8] sm:$0xff]
        %v1705 = vld [vmem:[%s2 + $0x10] sm:$0xff]
        %v1706 = vld [vmem:[%s2 + $0x18] sm:$0xff]
        %v1707 = vld [vmem:[#allocation5 + $0x3] sm:$0x1]
        %v1708 = vlaneseq
        %v1709 = vshrl.u32 %v1708, 7
        %v1710 = vsub.s32 0, %v1709
        %v1711 = vrot.slane %v1707, %v1710
        %v1713 = vsel %vm352, %v1702, 0
        %1715 = vmatprep.subr.mxu0 0.0
        %1716 = vmatpush1.msra.mxu0 0.0
        %1717 = vmatprep.subr.mxu0 0.0
        %1718 = vmatpush1.msra.mxu0 0.0
        %1719 = vmatprep.subr.mxu0 0.0
        %1720 = vmatpush1.msra.mxu0 0.0
        %1721 = vmatprep.subr.mxu0 0.0
        %1722 = vmatpush1.msra.mxu0 0.0
        %1723 = vmatprep.subr.mxu0 0.0
        %1724 = vmatpush1.msra.mxu0 0.0
        %1725 = vmatprep.subr.mxu0 0.0
        %1726 = vmatpush1.msra.mxu0 0.0
        %1727 = vmatprep.subr.mxu0 0.0
        %1728 = vmatpush1.msra.mxu0 0.0
        %1729 = vmatprep.subr.mxu0 0.0
        %1730 = vmatpush1.msra.mxu0 0.0
        %1731 = vmatprep.subr.mxu0 0.0
        %1732 = vmatpush1.msra.mxu0 0.0
        %1733 = vmatprep.subr.mxu0 0.0
        %1734 = vmatpush1.msra.mxu0 0.0
        %1735 = vmatprep.subr.mxu0 0.0
        %1736 = vmatpush1.msra.mxu0 0.0
        %1737 = vmatprep.subr.mxu0 0.0
        %1738 = vmatpush1.msra.mxu0 0.0
        %1739 = vmatprep.subr.mxu0 0.0
        %1740 = vmatpush1.msra.mxu0 %v1706
        %1741 = vmatprep.subr.mxu0 0.0
        %1742 = vmatpush1.msra.mxu0 %v1705
        %1743 = vmatprep.subr.mxu0 0.0
        %1744 = vmatpush1.msra.mxu0 %v1704
        %1745 = vmatprep.subr.mxu0 0.0
        %1746 = vmatpush1.msra.mxu0 %v1703
        %1747 = vmatprep.subr.mxu0 0.0
        %1748 = vmatpush2.msra.mxu0 0.0
        %1749 = vmatprep.subr.mxu0 0.0
        %1750 = vmatpush2.msra.mxu0 0.0
        %1751 = vmatprep.subr.mxu0 0.0
        %1752 = vmatpush2.msra.mxu0 0.0
        %1753 = vmatprep.subr.mxu0 0.0
        %1754 = vmatpush2.msra.mxu0 0.0
        %1755 = vmatprep.subr.mxu0 0.0
        %1756 = vmatpush2.msra.mxu0 0.0
        %1757 = vmatprep.subr.mxu0 0.0
        %1758 = vmatpush2.msra.mxu0 0.0
        %1759 = vmatprep.subr.mxu0 0.0
        %1760 = vmatpush2.msra.mxu0 0.0
        %1761 = vmatprep.subr.mxu0 0.0
        %1762 = vmatpush2.msra.mxu0 0.0
        %1763 = vmatprep.subr.mxu0 0.0
        %1764 = vmatpush2.msra.mxu0 0.0
        %1765 = vmatprep.subr.mxu0 0.0
        %1766 = vmatpush2.msra.mxu0 0.0
        %1767 = vmatprep.subr.mxu0 0.0
        %1768 = vmatpush2.msra.mxu0 0.0
        %1769 = vmatprep.subr.mxu0 0.0
        %1770 = vmatpush2.msra.mxu0 0.0
        %1771 = vmatprep.subr.mxu0 0.0
        %1772 = vmatpush2.msra.mxu0 0.0
        %1773 = vmatprep.subr.mxu0 0.0
        %1774 = vmatpush2.msra.mxu0 0.0
        %1775 = vmatprep.subr.mxu0 0.0
        %1776 = vmatpush2.msra.mxu0 0.0
        %1777 = vmatprep.subr.mxu0 0.0
        %1778 = vmatpush2.msra.mxu0 0.0
        %1779 = vmatprep.mubr.f32.mxu0 0.0
        %1780 = vmatmul.mubr.f32.gmra.mxu0 %v1713
        %v1781 = vpop.f32.mrf.mxu0
        %v1782 = vadd.f32 %v1711, %v1781
        %v1783 = vpop.f32.mrf.mxu0
        %1784 = vdwg.mxu0
        %v1785 = vadd.f32 %v347, %v1782
        %v1786 = vld [vmem:[#allocation5 + $0x5] sm:$0x1]
        %v1787 = vld [vmem:[#allocation5 + $0x6] sm:$0x1]
        %v1788 = vsel %vm352, %v1785, 0.0
        %1789 = vadd.xlane.f32.xlu0 %v1788
        %v1790 = vpop.xlane.xlu0 %1789
        %v1791 = vrcp.pop 32.0
        %v1792 = vmul.f32 %v1790, %v1791
        %v1793 = vsub.f32 %v1785, %v1792
        %v1794 = vmul.f32 %v1793, %v1793
        %v1795 = vsel %vm352, %v1794, 0.0
        %1796 = vadd.xlane.f32.xlu0 %v1795
        %v1797 = vpop.xlane.xlu0 %1796
        %v1798 = vmul.f32 %v1797, %v1791
        %v1799 = vadd.f32 %v1798, 1e-05
        %v1800 = vrsqrt.pop %v1799
        %v1801 = vmul.f32 %v1793, %v1800
        %v1802 = vlaneseq
        %v1803 = vshrl.u32 %v1802, 7
        %v1804 = vsub.s32 0, %v1803
        %v1805 = vrot.slane %v1786, %v1804
        %v1806 = vmul.f32 %v1801, %v1805
        %v1807 = vlaneseq
        %v1808 = vshrl.u32 %v1807, 7
        %v1809 = vsub.s32 0, %v1808
        %v1810 = vrot.slane %v1787, %v1809
        %v1811 = vadd.f32 %v1806, %v1810
        %v1812 = vld [vmem:[%s3] sm:$0xff]
        %v1813 = vld [vmem:[%s3 + $0x8] sm:$0xff]
        %v1814 = vld [vmem:[%s3 + $0x10] sm:$0xff]
        %v1815 = vld [vmem:[%s3 + $0x18] sm:$0xff]
        %v1816 = vld [vmem:[%s4] sm:$0x1]
        %v1818 = vlaneseq
        %v1819 = vshrl.u32 %v1818, 7
        %v1820 = vsub.s32 0, %v1819
        %v1821 = vrot.slane %v1816, %v1820
        %v1824 = vsel %vm352, %v1811, 0
        %1826 = vmatprep.subr.mxu0 0.0
        %1827 = vmatpush1.msra.mxu0 0.0
        %1828 = vmatprep.subr.mxu0 0.0
        %1829 = vmatpush1.msra.mxu0 0.0
        %1830 = vmatprep.subr.mxu0 0.0
        %1831 = vmatpush1.msra.mxu0 0.0
        %1832 = vmatprep.subr.mxu0 0.0
        %1833 = vmatpush1.msra.mxu0 0.0
        %1834 = vmatprep.subr.mxu0 0.0
        %1835 = vmatpush1.msra.mxu0 0.0
        %1836 = vmatprep.subr.mxu0 0.0
        %1837 = vmatpush1.msra.mxu0 0.0
        %1838 = vmatprep.subr.mxu0 0.0
        %1839 = vmatpush1.msra.mxu0 0.0
        %1840 = vmatprep.subr.mxu0 0.0
        %1841 = vmatpush1.msra.mxu0 0.0
        %1842 = vmatprep.subr.mxu0 0.0
        %1843 = vmatpush1.msra.mxu0 0.0
        %1844 = vmatprep.subr.mxu0 0.0
        %1845 = vmatpush1.msra.mxu0 0.0
        %1846 = vmatprep.subr.mxu0 0.0
        %1847 = vmatpush1.msra.mxu0 0.0
        %1848 = vmatprep.subr.mxu0 0.0
        %1849 = vmatpush1.msra.mxu0 0.0
        %1850 = vmatprep.subr.mxu0 0.0
        %1851 = vmatpush1.msra.mxu0 %v1815
        %1852 = vmatprep.subr.mxu0 0.0
        %1853 = vmatpush1.msra.mxu0 %v1814
        %1854 = vmatprep.subr.mxu0 0.0
        %1855 = vmatpush1.msra.mxu0 %v1813
        %1856 = vmatprep.subr.mxu0 0.0
        %1857 = vmatpush1.msra.mxu0 %v1812
        %1858 = vmatprep.subr.mxu0 0.0
        %1859 = vmatpush2.msra.mxu0 0.0
        %1860 = vmatprep.subr.mxu0 0.0
        %1861 = vmatpush2.msra.mxu0 0.0
        %1862 = vmatprep.subr.mxu0 0.0
        %1863 = vmatpush2.msra.mxu0 0.0
        %1864 = vmatprep.subr.mxu0 0.0
        %1865 = vmatpush2.msra.mxu0 0.0
        %1866 = vmatprep.subr.mxu0 0.0
        %1867 = vmatpush2.msra.mxu0 0.0
        %1868 = vmatprep.subr.mxu0 0.0
        %1869 = vmatpush2.msra.mxu0 0.0
        %1870 = vmatprep.subr.mxu0 0.0
        %1871 = vmatpush2.msra.mxu0 0.0
        %1872 = vmatprep.subr.mxu0 0.0
        %1873 = vmatpush2.msra.mxu0 0.0
        %1874 = vmatprep.subr.mxu0 0.0
        %1875 = vmatpush2.msra.mxu0 0.0
        %1876 = vmatprep.subr.mxu0 0.0
        %1877 = vmatpush2.msra.mxu0 0.0
        %1878 = vmatprep.subr.mxu0 0.0
        %1879 = vmatpush2.msra.mxu0 0.0
        %1880 = vmatprep.subr.mxu0 0.0
        %1881 = vmatpush2.msra.mxu0 0.0
        %1882 = vmatprep.subr.mxu0 0.0
        %1883 = vmatpush2.msra.mxu0 0.0
        %1884 = vmatprep.subr.mxu0 0.0
        %1885 = vmatpush2.msra.mxu0 0.0
        %1886 = vmatprep.subr.mxu0 0.0
        %1887 = vmatpush2.msra.mxu0 0.0
        %1888 = vmatprep.subr.mxu0 0.0
        %1889 = vmatpush2.msra.mxu0 0.0
        %1890 = vmatprep.mubr.f32.mxu0 0.0
        %1891 = vmatmul.mubr.f32.gmra.mxu0 %v1824
        %v1892 = vpop.f32.mrf.mxu0
        %v1893 = vadd.f32 %v1821, %v1892
        %v1894 = vpop.f32.mrf.mxu0
        %1895 = vdwg.mxu0
        %v1896 = vmax.f32 %v1893, 0.0
        %v1897 = vld [vmem:[%s5] sm:$0xff]
        %v1898 = vld [vmem:[%s5 + $0x8] sm:$0xff]
        %v1899 = vld [vmem:[%s5 + $0x10] sm:$0xff]
        %v1900 = vld [vmem:[%s5 + $0x18] sm:$0xff]
        %v1901 = vld [vmem:[%s5 + $0x20] sm:$0xff]
        %v1902 = vld [vmem:[%s5 + $0x28] sm:$0xff]
        %v1903 = vld [vmem:[%s5 + $0x30] sm:$0xff]
        %v1904 = vld [vmem:[%s5 + $0x38] sm:$0xff]
        %v1905 = vld [vmem:[#allocation5 + $0x4] sm:$0x1]
        %v1906 = vlaneseq
        %v1907 = vshrl.u32 %v1906, 7
        %v1908 = vsub.s32 0, %v1907
        %v1909 = vrot.slane %v1905, %v1908
        %vm1910 = vcmask 523264
        %v1912 = vsel %vm1910, %v1896, 0
        %1914 = vmatprep.subr.mxu0 0.0
        %1915 = vmatpush1.msra.mxu0 0.0
        %1916 = vmatprep.subr.mxu0 0.0
        %1917 = vmatpush1.msra.mxu0 0.0
        %1918 = vmatprep.subr.mxu0 0.0
        %1919 = vmatpush1.msra.mxu0 0.0
        %1920 = vmatprep.subr.mxu0 0.0
        %1921 = vmatpush1.msra.mxu0 0.0
        %1922 = vmatprep.subr.mxu0 0.0
        %1923 = vmatpush1.msra.mxu0 0.0
        %1924 = vmatprep.subr.mxu0 0.0
        %1925 = vmatpush1.msra.mxu0 0.0
        %1926 = vmatprep.subr.mxu0 0.0
        %1927 = vmatpush1.msra.mxu0 0.0
        %1928 = vmatprep.subr.mxu0 0.0
        %1929 = vmatpush1.msra.mxu0 0.0
        %1930 = vmatprep.subr.mxu0 0.0
        %1931 = vmatpush1.msra.mxu0 %v1904
        %1932 = vmatprep.subr.mxu0 0.0
        %1933 = vmatpush1.msra.mxu0 %v1903
        %1934 = vmatprep.subr.mxu0 0.0
        %1935 = vmatpush1.msra.mxu0 %v1902
        %1936 = vmatprep.subr.mxu0 0.0
        %1937 = vmatpush1.msra.mxu0 %v1901
        %1938 = vmatprep.subr.mxu0 0.0
        %1939 = vmatpush1.msra.mxu0 %v1900
        %1940 = vmatprep.subr.mxu0 0.0
        %1941 = vmatpush1.msra.mxu0 %v1899
        %1942 = vmatprep.subr.mxu0 0.0
        %1943 = vmatpush1.msra.mxu0 %v1898
        %1944 = vmatprep.subr.mxu0 0.0
        %1945 = vmatpush1.msra.mxu0 %v1897
        %1946 = vmatprep.subr.mxu0 0.0
        %1947 = vmatpush2.msra.mxu0 0.0
        %1948 = vmatprep.subr.mxu0 0.0
        %1949 = vmatpush2.msra.mxu0 0.0
        %1950 = vmatprep.subr.mxu0 0.0
        %1951 = vmatpush2.msra.mxu0 0.0
        %1952 = vmatprep.subr.mxu0 0.0
        %1953 = vmatpush2.msra.mxu0 0.0
        %1954 = vmatprep.subr.mxu0 0.0
        %1955 = vmatpush2.msra.mxu0 0.0
        %1956 = vmatprep.subr.mxu0 0.0
        %1957 = vmatpush2.msra.mxu0 0.0
        %1958 = vmatprep.subr.mxu0 0.0
        %1959 = vmatpush2.msra.mxu0 0.0
        %1960 = vmatprep.subr.mxu0 0.0
        %1961 = vmatpush2.msra.mxu0 0.0
        %1962 = vmatprep.subr.mxu0 0.0
        %1963 = vmatpush2.msra.mxu0 0.0
        %1964 = vmatprep.subr.mxu0 0.0
        %1965 = vmatpush2.msra.mxu0 0.0
        %1966 = vmatprep.subr.mxu0 0.0
        %1967 = vmatpush2.msra.mxu0 0.0
        %1968 = vmatprep.subr.mxu0 0.0
        %1969 = vmatpush2.msra.mxu0 0.0
        %1970 = vmatprep.subr.mxu0 0.0
        %1971 = vmatpush2.msra.mxu0 0.0
        %1972 = vmatprep.subr.mxu0 0.0
        %1973 = vmatpush2.msra.mxu0 0.0
        %1974 = vmatprep.subr.mxu0 0.0
        %1975 = vmatpush2.msra.mxu0 0.0
        %1976 = vmatprep.subr.mxu0 0.0
        %1977 = vmatpush2.msra.mxu0 0.0
        %1978 = vmatprep.mubr.f32.mxu0 0.0
        %1979 = vmatmul.mubr.f32.gmra.mxu0 %v1912
        %v1980 = vpop.f32.mrf.mxu0
        %v1981 = vadd.f32 %v1909, %v1980
        %v1982 = vpop.f32.mrf.mxu0
        %1983 = vdwg.mxu0
        %1984 = vst.msk [vmem:[%s346] sm:$0xff] %vm352, %v1981
        %v1985 = vadd.f32 %v1811, %v1981
        %v1986 = vld [vmem:[#allocation5 + $0x7] sm:$0x1]
        %v1987 = vld [vmem:[#allocation5 + $0x8] sm:$0x1]
        %v1988 = vsel %vm352, %v1985, 0.0
        %1989 = vadd.xlane.f32.xlu0 %v1988
        %v1990 = vpop.xlane.xlu0 %1989
        %v1991 = vmul.f32 %v1990, %v1791
        %v1992 = vsub.f32 %v1985, %v1991
        %v1993 = vmul.f32 %v1992, %v1992
        %v1994 = vsel %vm352, %v1993, 0.0
        %1995 = vadd.xlane.f32.xlu0 %v1994
        %v1996 = vpop.xlane.xlu0 %1995
        %v1997 = vmul.f32 %v1996, %v1791
        %v1998 = vadd.f32 %v1997, 1e-05
        %v1999 = vrsqrt.pop %v1998
        %v2000 = vmul.f32 %v1992, %v1999
        %v2001 = vlaneseq
        %v2002 = vshrl.u32 %v2001, 7
        %v2003 = vsub.s32 0, %v2002
        %v2004 = vrot.slane %v1986, %v2003
        %v2005 = vmul.f32 %v2000, %v2004
        %v2006 = vlaneseq
        %v2007 = vshrl.u32 %v2006, 7
        %v2008 = vsub.s32 0, %v2007
        %v2009 = vrot.slane %v1987, %v2008
        %v2010 = vadd.f32 %v2005, %v2009
        %2011 = vst.msk [vmem:[%s339] sm:$0xff] %vm352, %v2010
        %s2012 = sand.u32 %s190, 1
        %s2013 = scalar_lea.sflag [#allocation4], %s2012
        %s2014 = sand.u32 %s190, 1
        %s2015 = smul.addr %s2014, 8
        %s2016 = scalar_lea.vmem [#allocation7], %s2015
        %s2017 = sand.u32 %s216, 1
        %s2018 = scalar_lea.sflag [#allocation9], %s2017
        %s2019 = sand.u32 %s216, 1
        %s2020 = smul.addr %s2019, 8
        %s2021 = scalar_lea.vmem [#allocation8], %s2020
        // Predicated region
        $region57: #{tpu_custom_call.1} parent=47 // pred_check
          %p2022 = pneg %p200
        $region58: #{tpu_custom_call.1} parent=47 // pred_check_branch
          %2024 = sbr.rel (%p2022) target = $region60
        $region59: #{tpu_custom_call.1} parent=47 // pred_region
          %s2026 = ssub.s32 128, 128
          %2027 = vsyncadd %s2013, %s2026
          %s2028 = smul.addr %s30, 128
          %s2029 = scalar_lea.hbm %s7, %s2028
          %s2031 = sshll.u32 %s2016, 4
          %s2032 = int_to_ptr.vmem [resolvable:$true] %s2031
          %2034 = dma.vmem_to_hbm [thread:$0]  %s2032, 128, %s2029, %s2013
        $region60: #{tpu_custom_call.1} parent=47 // pred_fallthru
          _
        // Predicated region
        $region61: #{tpu_custom_call.1} parent=47 // pred_check
          %p2035 = pneg %p226
        $region62: #{tpu_custom_call.1} parent=47 // pred_check_branch
          %2037 = sbr.rel (%p2035) target = $region64
        $region63: #{tpu_custom_call.1} parent=47 // pred_region
          %s2039 = ssub.s32 128, 128
          %2040 = vsyncadd %s2018, %s2039
          %s2041 = smul.addr %s30, 128
          %s2042 = scalar_lea.hbm %s8, %s2041
          %s2044 = sshll.u32 %s2021, 4
          %s2045 = int_to_ptr.vmem [resolvable:$true] %s2044
          %2047 = dma.vmem_to_hbm [thread:$0]  %s2045, 128, %s2042, %s2018
        $region64: #{tpu_custom_call.1} parent=47 // pred_fallthru
          _
      $region48: #{tpu_custom_call.1} parent=5 // pred_fallthru
        _
      %p2048 = scmp.le.s32.totalorder 2, %s25
      // Predicated region
      $region65: #{tpu_custom_call.1} parent=5 // pred_check
        %p2049 = pneg %p2048
      $region66: #{tpu_custom_call.1} parent=5 // pred_check_branch
        %2051 = sbr.rel (%p2049) target = $region68
      $region67: #{tpu_custom_call.1} parent=5 // pred_region
        %s2052 = ssub.s32 %s25, 2
        // Predicated region
        $region69: #{tpu_custom_call.1} parent=67 // pred_check
          %p2053 = pneg %p206
        $region70: #{tpu_custom_call.1} parent=67 // pred_check_branch
          %2055 = sbr.rel (%p2053) target = $region72
        $region71: #{tpu_custom_call.1} parent=67 // pred_region
          %s2056 = sand.u32 %s191, 1
          %s2057 = scalar_lea.sflag [#allocation4], %s2056
          %s2058 = sand.u32 %s191, 1
          %s2059 = smul.addr %s2058, 8
          %s2060 = scalar_lea.vmem [#allocation7], %s2059
          %2061 = dma.done %s2057, 128
        $region72: #{tpu_custom_call.1} parent=67 // pred_fallthru
          _
        // Predicated region
        $region73: #{tpu_custom_call.1} parent=67 // pred_check
          %p2062 = pneg %p232
        $region74: #{tpu_custom_call.1} parent=67 // pred_check_branch
          %2064 = sbr.rel (%p2062) target = $region76
        $region75: #{tpu_custom_call.1} parent=67 // pred_region
          %s2065 = sand.u32 %s217, 1
          %s2066 = scalar_lea.sflag [#allocation9], %s2065
          %s2067 = sand.u32 %s217, 1
          %s2068 = smul.addr %s2067, 8
          %s2069 = scalar_lea.vmem [#allocation8], %s2068
          %2070 = dma.done %s2066, 128
        $region76: #{tpu_custom_call.1} parent=67 // pred_fallthru
          _
      $region68: #{tpu_custom_call.1} parent=5 // pred_fallthru
        _
    $region6: #{tpu_custom_call.1} parent=1 // loop_footer
      %s29 = sadd.s32 1, %s25
    $region7: #{tpu_custom_call.1} parent=1 // loop_footer_branch
      %24 = sbr.rel target = $region3
    $region8: #{tpu_custom_call.1} parent=1 // loop_exit
      _
    %2071 = vsyncpa [#allocation3], 1
    %s2072 = scalar_lea.sflag [#allocation3], 1
    %2073 = vsyncpa %s2072, 1
    %2074 = vsyncpa [#allocation6], 1
    %2075 = vsyncpa [#allocation4], 1
    %s2076 = scalar_lea.sflag [#allocation4], 1
    %2077 = vsyncpa %s2076, 1
    %2078 = vsyncpa [#allocation9], 1
    %s2079 = scalar_lea.sflag [#allocation9], 1
    %2080 = vsyncpa %s2079, 1

</llo_original>
